<compile_context>
chip_gen: v7x
topology: tpu7x:2x2x1
jax: 0.10.0
libtpu: 0.0.40
codegen_flags: <defaults>
</compile_context>

<pallas_src>
import functools
import numpy as np
import jax
import jax.numpy as jnp
from jax.experimental import pallas as pl
from jax.experimental.pallas import tpu as pltpu

LN_EPS = 1e-12


def _layer_norm(x, g, b):
    mu = jnp.mean(x, axis=-1, keepdims=True)
    var = jnp.mean((x - mu) ** 2, axis=-1, keepdims=True)
    return (x - mu) * jax.lax.rsqrt(var + LN_EPS) * g + b


def molt_layer_kernel(xq_ref, xkv_ref, mask_ref,
                      wq_ref, bq_ref, wkv_ref, bkv_ref,
                      wao_ref, bao_ref, lng_ref, lnb_ref,
                      plg_ref, plb_ref, wi_ref, wo_ref,
                      out_ref, ctx_ref, *, num_heads):
    xq = xq_ref[0]                        # (TQ, H) f32 — query tile
    xkv = xkv_ref[0]                      # (S, H)  f32 — full sequence (K/V)
    TQ, H = xq.shape
    S = xkv.shape[0]
    dh = H // num_heads
    scale = 1.0 / float(np.sqrt(dh))

    # ---- projections: Q for the tile, fused K|V for the full sequence ----
    q = jnp.dot(xq.astype(jnp.bfloat16), wq_ref[...],
                preferred_element_type=jnp.float32) + bq_ref[...]      # (TQ, H)
    kv = jnp.dot(xkv.astype(jnp.bfloat16), wkv_ref[...],
                 preferred_element_type=jnp.float32) + bkv_ref[...]    # (S, 2H)
    k = kv[:, :H]
    v = kv[:, H:]
    q = q * scale                                                      # f32

    # additive attention mask; broadcast hoisted out of the head loop.
    mask_b = jnp.broadcast_to(mask_ref[0], (TQ, S))                    # (TQ, S)

    # ---- per-head attention; contexts written into one (TQ,H) scratch ----
    # num_heads is small here, so a static unroll is fine.
    # TODO(synk): use a batched dot_general / fori_loop for large head counts.
    for h in range(num_heads):
        sl = slice(h * dh, (h + 1) * dh)
        qh = q[:, sl].astype(jnp.bfloat16)                             # (TQ, dh)
        kh = k[:, sl].astype(jnp.bfloat16)                             # (S, dh)
        # contract last dims directly — no kh.T materialized.
        s = jax.lax.dot_general(qh, kh, (((1,), (1,)), ((), ())),
                                preferred_element_type=jnp.float32)    # (TQ, S)
        s = s + mask_b
        s = s - jnp.max(s, axis=-1, keepdims=True)
        p = jnp.exp(s)
        p = p * pl.reciprocal(jnp.sum(p, axis=-1, keepdims=True), approx=True)
        ctx_ref[:, sl] = jnp.dot(p.astype(jnp.bfloat16),
                                 v[:, sl].astype(jnp.bfloat16),
                                 preferred_element_type=jnp.float32)   # (TQ, dh)

    # single full-width output projection (K = H on the MXU).
    attn_proj = jnp.dot(ctx_ref[...].astype(jnp.bfloat16), wao_ref[...],
                        preferred_element_type=jnp.float32) + bao_ref[...]

    # BERT-style self-output: LayerNorm(dense(ctx) + residual)    (f32)
    attn_out = _layer_norm(attn_proj + xq, lng_ref[...], lnb_ref[...])

    # ---- feed_forward_chunk: pre_ln -> intermediate (GELU, no bias)
    # ----                     -> output dense (no bias) + residual w/ pre_ln out
    y = _layer_norm(attn_out, plg_ref[...], plb_ref[...])
    inter = jax.nn.gelu(
        jnp.dot(y.astype(jnp.bfloat16), wi_ref[...],
                preferred_element_type=jnp.float32),
        approximate=True)
    ffo = jnp.dot(inter.astype(jnp.bfloat16), wo_ref[...],
                  preferred_element_type=jnp.float32)
    out_ref[0] = ffo + y


def _vmem_limit_bytes():
    try:
        cap = int(pltpu.get_tpu_info().vmem_capacity_bytes)
    except Exception:
        cap = 64 * 1024 * 1024
    # leave headroom: ~96 MiB on v5e/v6e (128 MiB physical), ~48 MiB on v7x (64 MiB).
    return min(int(cap * 0.75), 100 * 1024 * 1024)


def molt_layer(x, mask, params, *, num_heads, q_tile=256):
    B, S, H = x.shape
    I = params["wi"].shape[1]
    assert H % num_heads == 0
    TQ = S if S <= q_tile else q_tile
    assert S % TQ == 0, "sequence length must be a multiple of the query tile"
    n_q = S // TQ

    bf16 = jnp.bfloat16
    # bf16 MXU inputs; biases / LayerNorm params stay f32.
    wq = params["wq"].astype(bf16)
    wkv = jnp.concatenate([params["wk"], params["wv"]], axis=1).astype(bf16)
    bkv = jnp.concatenate([params["bk"], params["bv"]], axis=1)
    wao = params["wao"].astype(bf16)
    wi = params["wi"].astype(bf16)
    wo = params["wout"].astype(bf16)
    mask3 = mask.reshape(B, 1, S)        # lane-dense (1,1,S) blocks

    def wspec(shape):
        return pl.BlockSpec(shape, lambda b, qi: (0, 0))

    in_specs = [
        pl.BlockSpec((1, TQ, H), lambda b, qi: (b, qi, 0)),   # x  (query tile)
        pl.BlockSpec((1, S, H), lambda b, qi: (b, 0, 0)),     # x  (full seq, K/V)
        pl.BlockSpec((1, 1, S), lambda b, qi: (b, 0, 0)),     # additive mask
        wspec((H, H)), wspec((1, H)),                         # wq, bq
        wspec((H, 2 * H)), wspec((1, 2 * H)),                 # fused wk|wv, bk|bv
        wspec((H, H)), wspec((1, H)),                         # attn output dense
        wspec((1, H)), wspec((1, H)),                         # attn LayerNorm g/b
        wspec((1, H)), wspec((1, H)),                         # pre_ln g/b
        wspec((H, I)),                                        # intermediate (no bias)
        wspec((I, H)),                                        # output dense (no bias)
    ]

    flops = int(2 * B * S * H * 3 * H            # QKV projections
                + 4 * B * S * S * H              # scores + context
                + 2 * B * S * H * H              # attention output dense
                + 4 * B * S * H * I)             # FFN in + out
    transcendentals = int(B * num_heads * S * S + B * S * I)
    w_bytes = 2 * (H * H + H * 2 * H + H * H + H * I + I * H)   # bf16 weights
    p_bytes = 4 * (H + 2 * H + H + 4 * H)                       # f32 biases/LN
    a_bytes = 4 * (2 * B * S * H + B * S * H + B * S)           # x (2 views) + out + mask
    bytes_accessed = int(w_bytes + p_bytes + a_bytes)

    kernel = functools.partial(molt_layer_kernel, num_heads=num_heads)
    return pl.pallas_call(
        kernel,
        out_shape=jax.ShapeDtypeStruct((B, S, H), jnp.float32),
        grid=(B, n_q),
        in_specs=in_specs,
        out_specs=pl.BlockSpec((1, TQ, H), lambda b, qi: (b, qi, 0)),
        scratch_shapes=[pltpu.VMEM((TQ, H), jnp.float32)],     # per-head ctx slab
        compiler_params=pltpu.CompilerParams(
            dimension_semantics=("parallel", "parallel"),
            vmem_limit_bytes=_vmem_limit_bytes()),
        cost_estimate=pl.CostEstimate(
            flops=flops, transcendentals=transcendentals,
            bytes_accessed=bytes_accessed),
    )(x, x, mask3,
      wq, params["bq"], wkv, bkv,
      wao, params["bao"], params["ln_g"], params["ln_b"],
      params["pl_g"], params["pl_b"], wi, wo)


def molt_layer_ref(x, mask, params, *, num_heads):
    """Pure-JAX f32 reference with identical semantics (for validation)."""
    B, S, H = x.shape
    dh = H // num_heads
    scale = 1.0 / float(np.sqrt(dh))
    q = x @ params["wq"] + params["bq"]
    k = x @ params["wk"] + params["bk"]
    v = x @ params["wv"] + params["bv"]
    qh = q.reshape(B, S, num_heads, dh).transpose(0, 2, 1, 3)
    kh = k.reshape(B, S, num_heads, dh).transpose(0, 2, 1, 3)
    vh = v.reshape(B, S, num_heads, dh).transpose(0, 2, 1, 3)
    s = jnp.einsum("bhqd,bhkd->bhqk", qh, kh) * scale + mask[:, None, None, :]
    p = jax.nn.softmax(s, axis=-1)
    ctx = jnp.einsum("bhqk,bhkd->bhqd", p, vh).transpose(0, 2, 1, 3).reshape(B, S, H)
    attn_proj = ctx @ params["wao"] + params["bao"]
    attn_out = _layer_norm(attn_proj + x, params["ln_g"], params["ln_b"])
    y = _layer_norm(attn_out, params["pl_g"], params["pl_b"])
    inter = jax.nn.gelu(y @ params["wi"], approximate=True)
    return inter @ params["wout"] + y


if __name__ == "__main__":
    B, S, H, I, NH = 2, 8, 32, 64, 4

    key = jax.random.PRNGKey(0)
    ks = jax.random.split(key, 16)
    scl = 0.05
    params = {
        "wq": jax.random.normal(ks[0], (H, H), jnp.float32) * scl,
        "bq": jax.random.normal(ks[1], (1, H), jnp.float32) * 0.01,
        "wk": jax.random.normal(ks[2], (H, H), jnp.float32) * scl,
        "bk": jax.random.normal(ks[3], (1, H), jnp.float32) * 0.01,
        "wv": jax.random.normal(ks[4], (H, H), jnp.float32) * scl,
        "bv": jax.random.normal(ks[5], (1, H), jnp.float32) * 0.01,
        "wao": jax.random.normal(ks[6], (H, H), jnp.float32) * scl,
        "bao": jax.random.normal(ks[7], (1, H), jnp.float32) * 0.01,
        "ln_g": 1.0 + 0.05 * jax.random.normal(ks[8], (1, H), jnp.float32),
        "ln_b": 0.01 * jax.random.normal(ks[9], (1, H), jnp.float32),
        "pl_g": 1.0 + 0.05 * jax.random.normal(ks[10], (1, H), jnp.float32),
        "pl_b": 0.01 * jax.random.normal(ks[11], (1, H), jnp.float32),
        "wi": jax.random.normal(ks[12], (H, I), jnp.float32) * scl,
        "wout": jax.random.normal(ks[13], (I, H), jnp.float32) * scl,
    }

    x = jax.random.normal(ks[14], (B, S, H), jnp.float32)
    # additive attention mask (0 = attend, -1e9 = masked); mask last 2 keys of batch 1
    mask = jnp.zeros((B, S), jnp.float32).at[1, -2:].set(-1e9)

    out = molt_layer(x, mask, params, num_heads=NH)
    out = jax.block_until_ready(out)

    ref = molt_layer_ref(x, mask, params, num_heads=NH)
    # bf16 MXU inputs (f32 accumulation) + approx-reciprocal softmax introduce
    # ~1e-2-scale deviation vs. the all-f32 reference; structural errors would
    # show up at O(1).
    np.testing.assert_allclose(np.asarray(out), np.asarray(ref), rtol=5e-2, atol=5e-2)

    print("KERNEL_OK")
</pallas_src>

<mosaic_0001>
module attributes {stable_mosaic.version = 11 : i64} {
  func.func @molt_layer_kernel(%arg0: i32, %arg1: i32, %arg2: memref<1x8x32xf32, #tpu.memory_space<vmem>>, %arg3: memref<1x8x32xf32, #tpu.memory_space<vmem>>, %arg4: memref<1x1x8xf32, #tpu.memory_space<vmem>>, %arg5: memref<32x32xbf16, #tpu.memory_space<vmem>>, %arg6: memref<1x32xf32, #tpu.memory_space<vmem>>, %arg7: memref<32x64xbf16, #tpu.memory_space<vmem>>, %arg8: memref<1x64xf32, #tpu.memory_space<vmem>>, %arg9: memref<32x32xbf16, #tpu.memory_space<vmem>>, %arg10: memref<1x32xf32, #tpu.memory_space<vmem>>, %arg11: memref<1x32xf32, #tpu.memory_space<vmem>>, %arg12: memref<1x32xf32, #tpu.memory_space<vmem>>, %arg13: memref<1x32xf32, #tpu.memory_space<vmem>>, %arg14: memref<1x32xf32, #tpu.memory_space<vmem>>, %arg15: memref<32x64xbf16, #tpu.memory_space<vmem>>, %arg16: memref<64x32xbf16, #tpu.memory_space<vmem>>, %arg17: memref<1x8x32xf32, #tpu.memory_space<vmem>>, %arg18: memref<8x32xf32, #tpu.memory_space<vmem>>) attributes {dimension_semantics = [#tpu.dimension_semantics<parallel>, #tpu.dimension_semantics<parallel>], iteration_bounds = array<i64: 2, 1>, scalar_prefetch = 0 : i64, scratch_operands = 1 : i64, tpu.core_type = #tpu.core_type<tc>, window_params = [{transform_indices = @transform_0, window_bounds = array<i64: 1, 8, 32>}, {transform_indices = @transform_1, window_bounds = array<i64: 1, 8, 32>}, {transform_indices = @transform_2, window_bounds = array<i64: 1, 1, 8>}, {pipeline_mode = #tpu.pipeline_mode<synchronous>, transform_indices = @transform_3, window_bounds = array<i64: 32, 32>}, {pipeline_mode = #tpu.pipeline_mode<synchronous>, transform_indices = @transform_4, window_bounds = array<i64: 1, 32>}, {pipeline_mode = #tpu.pipeline_mode<synchronous>, transform_indices = @transform_5, window_bounds = array<i64: 32, 64>}, {pipeline_mode = #tpu.pipeline_mode<synchronous>, transform_indices = @transform_6, window_bounds = array<i64: 1, 64>}, {pipeline_mode = #tpu.pipeline_mode<synchronous>, transform_indices = @transform_7, window_bounds = array<i64: 32, 32>}, {pipeline_mode = #tpu.pipeline_mode<synchronous>, transform_indices = @transform_8, window_bounds = array<i64: 1, 32>}, {pipeline_mode = #tpu.pipeline_mode<synchronous>, transform_indices = @transform_9, window_bounds = array<i64: 1, 32>}, {pipeline_mode = #tpu.pipeline_mode<synchronous>, transform_indices = @transform_10, window_bounds = array<i64: 1, 32>}, {pipeline_mode = #tpu.pipeline_mode<synchronous>, transform_indices = @transform_11, window_bounds = array<i64: 1, 32>}, {pipeline_mode = #tpu.pipeline_mode<synchronous>, transform_indices = @transform_12, window_bounds = array<i64: 1, 32>}, {pipeline_mode = #tpu.pipeline_mode<synchronous>, transform_indices = @transform_13, window_bounds = array<i64: 32, 64>}, {pipeline_mode = #tpu.pipeline_mode<synchronous>, transform_indices = @transform_14, window_bounds = array<i64: 64, 32>}, {transform_indices = @transform_15, window_bounds = array<i64: 1, 8, 32>}]} {
    %c0 = arith.constant 0 : index
    %c0_0 = arith.constant 0 : index
    %c0_1 = arith.constant 0 : index
    %0 = vector.load %arg2[%c0, %c0_0, %c0_1] : memref<1x8x32xf32, #tpu.memory_space<vmem>>, vector<1x8x32xf32>
    %1 = vector.shape_cast %0 : vector<1x8x32xf32> to vector<8x32xf32>
    %c0_2 = arith.constant 0 : index
    %c0_3 = arith.constant 0 : index
    %c0_4 = arith.constant 0 : index
    %2 = vector.load %arg3[%c0_2, %c0_3, %c0_4] : memref<1x8x32xf32, #tpu.memory_space<vmem>>, vector<1x8x32xf32>
    %3 = vector.shape_cast %2 : vector<1x8x32xf32> to vector<8x32xf32>
    %4 = arith.truncf %1 : vector<8x32xf32> to vector<8x32xbf16>
    %c0_5 = arith.constant 0 : index
    %c0_6 = arith.constant 0 : index
    %5 = vector.load %arg5[%c0_5, %c0_6] : memref<32x32xbf16, #tpu.memory_space<vmem>>, vector<32x32xbf16>
    %cst = arith.constant dense<0.000000e+00> : vector<8x32xf32>
    %6 = tpu.matmul %4, %5, %cst {dimension_numbers = #tpu.dot_dimension_numbers<[1], [0], [0], [1], [0, 0, 1, 1], [], []>} : vector<8x32xbf16>, vector<32x32xbf16>, vector<8x32xf32> -> vector<8x32xf32>
    %c0_7 = arith.constant 0 : index
    %c0_8 = arith.constant 0 : index
    %7 = vector.load %arg6[%c0_7, %c0_8] : memref<1x32xf32, #tpu.memory_space<vmem>>, vector<1x32xf32>
    %8 = vector.broadcast %7 : vector<1x32xf32> to vector<8x32xf32>
    %9 = arith.addf %6, %8 : vector<8x32xf32>
    %10 = arith.truncf %3 : vector<8x32xf32> to vector<8x32xbf16>
    %c0_9 = arith.constant 0 : index
    %c0_10 = arith.constant 0 : index
    %11 = vector.load %arg7[%c0_9, %c0_10] : memref<32x64xbf16, #tpu.memory_space<vmem>>, vector<32x64xbf16>
    %cst_11 = arith.constant dense<0.000000e+00> : vector<8x64xf32>
    %12 = tpu.matmul %10, %11, %cst_11 {dimension_numbers = #tpu.dot_dimension_numbers<[1], [0], [0], [1], [0, 0, 1, 1], [], []>} : vector<8x32xbf16>, vector<32x64xbf16>, vector<8x64xf32> -> vector<8x64xf32>
    %c0_12 = arith.constant 0 : index
    %c0_13 = arith.constant 0 : index
    %13 = vector.load %arg8[%c0_12, %c0_13] : memref<1x64xf32, #tpu.memory_space<vmem>>, vector<1x64xf32>
    %14 = vector.broadcast %13 : vector<1x64xf32> to vector<8x64xf32>
    %15 = arith.addf %12, %14 : vector<8x64xf32>
    %16 = vector.extract_strided_slice %15 {offsets = [0, 0], sizes = [8, 32], strides = [1, 1]} : vector<8x64xf32> to vector<8x32xf32>
    %17 = vector.extract_strided_slice %15 {offsets = [0, 32], sizes = [8, 32], strides = [1, 1]} : vector<8x64xf32> to vector<8x32xf32>
    %cst_14 = arith.constant 0.353553385 : f32
    %18 = vector.broadcast %cst_14 : f32 to vector<8x32xf32>
    %19 = arith.mulf %9, %18 : vector<8x32xf32>
    %c0_15 = arith.constant 0 : index
    %c0_16 = arith.constant 0 : index
    %c0_17 = arith.constant 0 : index
    %20 = vector.load %arg4[%c0_15, %c0_16, %c0_17] : memref<1x1x8xf32, #tpu.memory_space<vmem>>, vector<1x1x8xf32>
    %21 = vector.shape_cast %20 : vector<1x1x8xf32> to vector<1x8xf32>
    %22 = vector.shape_cast %21 : vector<1x8xf32> to vector<1x8xf32>
    %23 = vector.broadcast %22 : vector<1x8xf32> to vector<8x8xf32>
    %24 = vector.extract_strided_slice %19 {offsets = [0, 0], sizes = [8, 8], strides = [1, 1]} : vector<8x32xf32> to vector<8x8xf32>
    %25 = arith.truncf %24 : vector<8x8xf32> to vector<8x8xbf16>
    %26 = vector.extract_strided_slice %16 {offsets = [0, 0], sizes = [8, 8], strides = [1, 1]} : vector<8x32xf32> to vector<8x8xf32>
    %27 = arith.truncf %26 : vector<8x8xf32> to vector<8x8xbf16>
    %cst_18 = arith.constant dense<0.000000e+00> : vector<8x8xf32>
    %28 = tpu.matmul %25, %27, %cst_18 {dimension_numbers = #tpu.dot_dimension_numbers<[1], [1], [0], [0], [0, 0, 1, 0], [], []>} : vector<8x8xbf16>, vector<8x8xbf16>, vector<8x8xf32> -> vector<8x8xf32>
    %29 = arith.addf %28, %23 : vector<8x8xf32>
    %cst_19 = arith.constant dense<0xFF800000> : vector<8xf32>
    %30 = vector.multi_reduction <maximumf>, %29, %cst_19 [1] : vector<8x8xf32> to vector<8xf32>
    %31 = vector.shape_cast %30 : vector<8xf32> to vector<8x1xf32>
    %32 = vector.broadcast %31 : vector<8x1xf32> to vector<8x8xf32>
    %33 = arith.subf %29, %32 : vector<8x8xf32>
    %34 = math.exp %33 : vector<8x8xf32>
    %cst_20 = arith.constant dense<0.000000e+00> : vector<8xf32>
    %35 = vector.multi_reduction <add>, %34, %cst_20 [1] : vector<8x8xf32> to vector<8xf32>
    %36 = vector.shape_cast %35 : vector<8xf32> to vector<8x1xf32>
    %37 = tpu.reciprocal %36 {approx = true} : vector<8x1xf32> -> vector<8x1xf32>
    %38 = vector.broadcast %37 : vector<8x1xf32> to vector<8x8xf32>
    %39 = arith.mulf %34, %38 : vector<8x8xf32>
    %40 = arith.truncf %39 : vector<8x8xf32> to vector<8x8xbf16>
    %41 = vector.extract_strided_slice %17 {offsets = [0, 0], sizes = [8, 8], strides = [1, 1]} : vector<8x32xf32> to vector<8x8xf32>
    %42 = arith.truncf %41 : vector<8x8xf32> to vector<8x8xbf16>
    %cst_21 = arith.constant dense<0.000000e+00> : vector<8x8xf32>
    %43 = tpu.matmul %40, %42, %cst_21 {dimension_numbers = #tpu.dot_dimension_numbers<[1], [0], [0], [1], [0, 0, 1, 1], [], []>} : vector<8x8xbf16>, vector<8x8xbf16>, vector<8x8xf32> -> vector<8x8xf32>
    %c0_22 = arith.constant 0 : index
    %c0_23 = arith.constant 0 : index
    %44 = vector.load %arg18[%c0_22, %c0_23] : memref<8x32xf32, #tpu.memory_space<vmem>>, vector<8x8xf32>
    tpu.vector_store %arg18[%c0_22, %c0_23], %43 {strides = array<i32>} : memref<8x32xf32, #tpu.memory_space<vmem>>, vector<8x8xf32>,
    %45 = vector.extract_strided_slice %19 {offsets = [0, 8], sizes = [8, 8], strides = [1, 1]} : vector<8x32xf32> to vector<8x8xf32>
    %46 = arith.truncf %45 : vector<8x8xf32> to vector<8x8xbf16>
    %47 = vector.extract_strided_slice %16 {offsets = [0, 8], sizes = [8, 8], strides = [1, 1]} : vector<8x32xf32> to vector<8x8xf32>
    %48 = arith.truncf %47 : vector<8x8xf32> to vector<8x8xbf16>
    %cst_24 = arith.constant dense<0.000000e+00> : vector<8x8xf32>
    %49 = tpu.matmul %46, %48, %cst_24 {dimension_numbers = #tpu.dot_dimension_numbers<[1], [1], [0], [0], [0, 0, 1, 0], [], []>} : vector<8x8xbf16>, vector<8x8xbf16>, vector<8x8xf32> -> vector<8x8xf32>
    %50 = arith.addf %49, %23 : vector<8x8xf32>
    %cst_25 = arith.constant dense<0xFF800000> : vector<8xf32>
    %51 = vector.multi_reduction <maximumf>, %50, %cst_25 [1] : vector<8x8xf32> to vector<8xf32>
    %52 = vector.shape_cast %51 : vector<8xf32> to vector<8x1xf32>
    %53 = vector.broadcast %52 : vector<8x1xf32> to vector<8x8xf32>
    %54 = arith.subf %50, %53 : vector<8x8xf32>
    %55 = math.exp %54 : vector<8x8xf32>
    %cst_26 = arith.constant dense<0.000000e+00> : vector<8xf32>
    %56 = vector.multi_reduction <add>, %55, %cst_26 [1] : vector<8x8xf32> to vector<8xf32>
    %57 = vector.shape_cast %56 : vector<8xf32> to vector<8x1xf32>
    %58 = tpu.reciprocal %57 {approx = true} : vector<8x1xf32> -> vector<8x1xf32>
    %59 = vector.broadcast %58 : vector<8x1xf32> to vector<8x8xf32>
    %60 = arith.mulf %55, %59 : vector<8x8xf32>
    %61 = arith.truncf %60 : vector<8x8xf32> to vector<8x8xbf16>
    %62 = vector.extract_strided_slice %17 {offsets = [0, 8], sizes = [8, 8], strides = [1, 1]} : vector<8x32xf32> to vector<8x8xf32>
    %63 = arith.truncf %62 : vector<8x8xf32> to vector<8x8xbf16>
    %cst_27 = arith.constant dense<0.000000e+00> : vector<8x8xf32>
    %64 = tpu.matmul %61, %63, %cst_27 {dimension_numbers = #tpu.dot_dimension_numbers<[1], [0], [0], [1], [0, 0, 1, 1], [], []>} : vector<8x8xbf16>, vector<8x8xbf16>, vector<8x8xf32> -> vector<8x8xf32>
    %c0_28 = arith.constant 0 : index
    %c8 = arith.constant 8 : index
    %65 = vector.load %arg18[%c0_28, %c8] : memref<8x32xf32, #tpu.memory_space<vmem>>, vector<8x8xf32>
    tpu.vector_store %arg18[%c0_28, %c8], %64 {strides = array<i32>} : memref<8x32xf32, #tpu.memory_space<vmem>>, vector<8x8xf32>,
    %66 = vector.extract_strided_slice %19 {offsets = [0, 16], sizes = [8, 8], strides = [1, 1]} : vector<8x32xf32> to vector<8x8xf32>
    %67 = arith.truncf %66 : vector<8x8xf32> to vector<8x8xbf16>
    %68 = vector.extract_strided_slice %16 {offsets = [0, 16], sizes = [8, 8], strides = [1, 1]} : vector<8x32xf32> to vector<8x8xf32>
    %69 = arith.truncf %68 : vector<8x8xf32> to vector<8x8xbf16>
    %cst_29 = arith.constant dense<0.000000e+00> : vector<8x8xf32>
    %70 = tpu.matmul %67, %69, %cst_29 {dimension_numbers = #tpu.dot_dimension_numbers<[1], [1], [0], [0], [0, 0, 1, 0], [], []>} : vector<8x8xbf16>, vector<8x8xbf16>, vector<8x8xf32> -> vector<8x8xf32>
    %71 = arith.addf %70, %23 : vector<8x8xf32>
    %cst_30 = arith.constant dense<0xFF800000> : vector<8xf32>
    %72 = vector.multi_reduction <maximumf>, %71, %cst_30 [1] : vector<8x8xf32> to vector<8xf32>
    %73 = vector.shape_cast %72 : vector<8xf32> to vector<8x1xf32>
    %74 = vector.broadcast %73 : vector<8x1xf32> to vector<8x8xf32>
    %75 = arith.subf %71, %74 : vector<8x8xf32>
    %76 = math.exp %75 : vector<8x8xf32>
    %cst_31 = arith.constant dense<0.000000e+00> : vector<8xf32>
    %77 = vector.multi_reduction <add>, %76, %cst_31 [1] : vector<8x8xf32> to vector<8xf32>
    %78 = vector.shape_cast %77 : vector<8xf32> to vector<8x1xf32>
    %79 = tpu.reciprocal %78 {approx = true} : vector<8x1xf32> -> vector<8x1xf32>
    %80 = vector.broadcast %79 : vector<8x1xf32> to vector<8x8xf32>
    %81 = arith.mulf %76, %80 : vector<8x8xf32>
    %82 = arith.truncf %81 : vector<8x8xf32> to vector<8x8xbf16>
    %83 = vector.extract_strided_slice %17 {offsets = [0, 16], sizes = [8, 8], strides = [1, 1]} : vector<8x32xf32> to vector<8x8xf32>
    %84 = arith.truncf %83 : vector<8x8xf32> to vector<8x8xbf16>
    %cst_32 = arith.constant dense<0.000000e+00> : vector<8x8xf32>
    %85 = tpu.matmul %82, %84, %cst_32 {dimension_numbers = #tpu.dot_dimension_numbers<[1], [0], [0], [1], [0, 0, 1, 1], [], []>} : vector<8x8xbf16>, vector<8x8xbf16>, vector<8x8xf32> -> vector<8x8xf32>
    %c0_33 = arith.constant 0 : index
    %c16 = arith.constant 16 : index
    %86 = vector.load %arg18[%c0_33, %c16] : memref<8x32xf32, #tpu.memory_space<vmem>>, vector<8x8xf32>
    tpu.vector_store %arg18[%c0_33, %c16], %85 {strides = array<i32>} : memref<8x32xf32, #tpu.memory_space<vmem>>, vector<8x8xf32>,
    %87 = vector.extract_strided_slice %19 {offsets = [0, 24], sizes = [8, 8], strides = [1, 1]} : vector<8x32xf32> to vector<8x8xf32>
    %88 = arith.truncf %87 : vector<8x8xf32> to vector<8x8xbf16>
    %89 = vector.extract_strided_slice %16 {offsets = [0, 24], sizes = [8, 8], strides = [1, 1]} : vector<8x32xf32> to vector<8x8xf32>
    %90 = arith.truncf %89 : vector<8x8xf32> to vector<8x8xbf16>
    %cst_34 = arith.constant dense<0.000000e+00> : vector<8x8xf32>
    %91 = tpu.matmul %88, %90, %cst_34 {dimension_numbers = #tpu.dot_dimension_numbers<[1], [1], [0], [0], [0, 0, 1, 0], [], []>} : vector<8x8xbf16>, vector<8x8xbf16>, vector<8x8xf32> -> vector<8x8xf32>
    %92 = arith.addf %91, %23 : vector<8x8xf32>
    %cst_35 = arith.constant dense<0xFF800000> : vector<8xf32>
    %93 = vector.multi_reduction <maximumf>, %92, %cst_35 [1] : vector<8x8xf32> to vector<8xf32>
    %94 = vector.shape_cast %93 : vector<8xf32> to vector<8x1xf32>
    %95 = vector.broadcast %94 : vector<8x1xf32> to vector<8x8xf32>
    %96 = arith.subf %92, %95 : vector<8x8xf32>
    %97 = math.exp %96 : vector<8x8xf32>
    %cst_36 = arith.constant dense<0.000000e+00> : vector<8xf32>
    %98 = vector.multi_reduction <add>, %97, %cst_36 [1] : vector<8x8xf32> to vector<8xf32>
    %99 = vector.shape_cast %98 : vector<8xf32> to vector<8x1xf32>
    %100 = tpu.reciprocal %99 {approx = true} : vector<8x1xf32> -> vector<8x1xf32>
    %101 = vector.broadcast %100 : vector<8x1xf32> to vector<8x8xf32>
    %102 = arith.mulf %97, %101 : vector<8x8xf32>
    %103 = arith.truncf %102 : vector<8x8xf32> to vector<8x8xbf16>
    %104 = vector.extract_strided_slice %17 {offsets = [0, 24], sizes = [8, 8], strides = [1, 1]} : vector<8x32xf32> to vector<8x8xf32>
    %105 = arith.truncf %104 : vector<8x8xf32> to vector<8x8xbf16>
    %cst_37 = arith.constant dense<0.000000e+00> : vector<8x8xf32>
    %106 = tpu.matmul %103, %105, %cst_37 {dimension_numbers = #tpu.dot_dimension_numbers<[1], [0], [0], [1], [0, 0, 1, 1], [], []>} : vector<8x8xbf16>, vector<8x8xbf16>, vector<8x8xf32> -> vector<8x8xf32>
    %c0_38 = arith.constant 0 : index
    %c24 = arith.constant 24 : index
    %107 = vector.load %arg18[%c0_38, %c24] : memref<8x32xf32, #tpu.memory_space<vmem>>, vector<8x8xf32>
    tpu.vector_store %arg18[%c0_38, %c24], %106 {strides = array<i32>} : memref<8x32xf32, #tpu.memory_space<vmem>>, vector<8x8xf32>,
    %c0_39 = arith.constant 0 : index
    %c0_40 = arith.constant 0 : index
    %108 = vector.load %arg18[%c0_39, %c0_40] : memref<8x32xf32, #tpu.memory_space<vmem>>, vector<8x32xf32>
    %109 = arith.truncf %108 : vector<8x32xf32> to vector<8x32xbf16>
    %c0_41 = arith.constant 0 : index
    %c0_42 = arith.constant 0 : index
    %110 = vector.load %arg9[%c0_41, %c0_42] : memref<32x32xbf16, #tpu.memory_space<vmem>>, vector<32x32xbf16>
    %cst_43 = arith.constant dense<0.000000e+00> : vector<8x32xf32>
    %111 = tpu.matmul %109, %110, %cst_43 {dimension_numbers = #tpu.dot_dimension_numbers<[1], [0], [0], [1], [0, 0, 1, 1], [], []>} : vector<8x32xbf16>, vector<32x32xbf16>, vector<8x32xf32> -> vector<8x32xf32>
    %c0_44 = arith.constant 0 : index
    %c0_45 = arith.constant 0 : index
    %112 = vector.load %arg10[%c0_44, %c0_45] : memref<1x32xf32, #tpu.memory_space<vmem>>, vector<1x32xf32>
    %113 = vector.broadcast %112 : vector<1x32xf32> to vector<8x32xf32>
    %114 = arith.addf %111, %113 : vector<8x32xf32>
    %115 = arith.addf %114, %1 : vector<8x32xf32>
    %c0_46 = arith.constant 0 : index
    %c0_47 = arith.constant 0 : index
    %116 = vector.load %arg11[%c0_46, %c0_47] : memref<1x32xf32, #tpu.memory_space<vmem>>, vector<1x32xf32>
    %c0_48 = arith.constant 0 : index
    %c0_49 = arith.constant 0 : index
    %117 = vector.load %arg12[%c0_48, %c0_49] : memref<1x32xf32, #tpu.memory_space<vmem>>, vector<1x32xf32>
    %cst_50 = arith.constant dense<0.000000e+00> : vector<8xf32>
    %118 = vector.multi_reduction <add>, %115, %cst_50 [1] : vector<8x32xf32> to vector<8xf32>
    %119 = vector.shape_cast %118 : vector<8xf32> to vector<8x1xf32>
    %cst_51 = arith.constant 3.200000e+01 : f32
    %120 = vector.broadcast %cst_51 : f32 to vector<8x1xf32>
    %121 = arith.divf %119, %120 : vector<8x1xf32>
    %122 = vector.broadcast %121 : vector<8x1xf32> to vector<8x32xf32>
    %123 = arith.subf %115, %122 : vector<8x32xf32>
    %124 = arith.mulf %123, %123 : vector<8x32xf32>
    %cst_52 = arith.constant dense<0.000000e+00> : vector<8xf32>
    %125 = vector.multi_reduction <add>, %124, %cst_52 [1] : vector<8x32xf32> to vector<8xf32>
    %126 = vector.shape_cast %125 : vector<8xf32> to vector<8x1xf32>
    %cst_53 = arith.constant 3.200000e+01 : f32
    %127 = vector.broadcast %cst_53 : f32 to vector<8x1xf32>
    %128 = arith.divf %126, %127 : vector<8x1xf32>
    %129 = vector.broadcast %121 : vector<8x1xf32> to vector<8x32xf32>
    %130 = arith.subf %115, %129 : vector<8x32xf32>
    %cst_54 = arith.constant 9.99999996E-13 : f32
    %131 = vector.broadcast %cst_54 : f32 to vector<8x1xf32>
    %132 = arith.addf %128, %131 : vector<8x1xf32>
    %133 = math.rsqrt %132 : vector<8x1xf32>
    %134 = vector.broadcast %133 : vector<8x1xf32> to vector<8x32xf32>
    %135 = arith.mulf %130, %134 : vector<8x32xf32>
    %136 = vector.broadcast %116 : vector<1x32xf32> to vector<8x32xf32>
    %137 = arith.mulf %135, %136 : vector<8x32xf32>
    %138 = vector.broadcast %117 : vector<1x32xf32> to vector<8x32xf32>
    %139 = arith.addf %137, %138 : vector<8x32xf32>
    %c0_55 = arith.constant 0 : index
    %c0_56 = arith.constant 0 : index
    %140 = vector.load %arg13[%c0_55, %c0_56] : memref<1x32xf32, #tpu.memory_space<vmem>>, vector<1x32xf32>
    %c0_57 = arith.constant 0 : index
    %c0_58 = arith.constant 0 : index
    %141 = vector.load %arg14[%c0_57, %c0_58] : memref<1x32xf32, #tpu.memory_space<vmem>>, vector<1x32xf32>
    %cst_59 = arith.constant dense<0.000000e+00> : vector<8xf32>
    %142 = vector.multi_reduction <add>, %139, %cst_59 [1] : vector<8x32xf32> to vector<8xf32>
    %143 = vector.shape_cast %142 : vector<8xf32> to vector<8x1xf32>
    %cst_60 = arith.constant 3.200000e+01 : f32
    %144 = vector.broadcast %cst_60 : f32 to vector<8x1xf32>
    %145 = arith.divf %143, %144 : vector<8x1xf32>
    %146 = vector.broadcast %145 : vector<8x1xf32> to vector<8x32xf32>
    %147 = arith.subf %139, %146 : vector<8x32xf32>
    %148 = arith.mulf %147, %147 : vector<8x32xf32>
    %cst_61 = arith.constant dense<0.000000e+00> : vector<8xf32>
    %149 = vector.multi_reduction <add>, %148, %cst_61 [1] : vector<8x32xf32> to vector<8xf32>
    %150 = vector.shape_cast %149 : vector<8xf32> to vector<8x1xf32>
    %cst_62 = arith.constant 3.200000e+01 : f32
    %151 = vector.broadcast %cst_62 : f32 to vector<8x1xf32>
    %152 = arith.divf %150, %151 : vector<8x1xf32>
    %153 = vector.broadcast %145 : vector<8x1xf32> to vector<8x32xf32>
    %154 = arith.subf %139, %153 : vector<8x32xf32>
    %cst_63 = arith.constant 9.99999996E-13 : f32
    %155 = vector.broadcast %cst_63 : f32 to vector<8x1xf32>
    %156 = arith.addf %152, %155 : vector<8x1xf32>
    %157 = math.rsqrt %156 : vector<8x1xf32>
    %158 = vector.broadcast %157 : vector<8x1xf32> to vector<8x32xf32>
    %159 = arith.mulf %154, %158 : vector<8x32xf32>
    %160 = vector.broadcast %140 : vector<1x32xf32> to vector<8x32xf32>
    %161 = arith.mulf %159, %160 : vector<8x32xf32>
    %162 = vector.broadcast %141 : vector<1x32xf32> to vector<8x32xf32>
    %163 = arith.addf %161, %162 : vector<8x32xf32>
    %164 = arith.truncf %163 : vector<8x32xf32> to vector<8x32xbf16>
    %c0_64 = arith.constant 0 : index
    %c0_65 = arith.constant 0 : index
    %165 = vector.load %arg15[%c0_64, %c0_65] : memref<32x64xbf16, #tpu.memory_space<vmem>>, vector<32x64xbf16>
    %cst_66 = arith.constant dense<0.000000e+00> : vector<8x64xf32>
    %166 = tpu.matmul %164, %165, %cst_66 {dimension_numbers = #tpu.dot_dimension_numbers<[1], [0], [0], [1], [0, 0, 1, 1], [], []>} : vector<8x32xbf16>, vector<32x64xbf16>, vector<8x64xf32> -> vector<8x64xf32>
    %167 = arith.mulf %166, %166 : vector<8x64xf32>
    %168 = arith.mulf %166, %167 : vector<8x64xf32>
    %cst_67 = arith.constant 4.471500e-02 : f32
    %169 = vector.broadcast %cst_67 : f32 to vector<8x64xf32>
    %170 = arith.mulf %169, %168 : vector<8x64xf32>
    %171 = arith.addf %166, %170 : vector<8x64xf32>
    %cst_68 = arith.constant 0.797884583 : f32
    %172 = vector.broadcast %cst_68 : f32 to vector<8x64xf32>
    %173 = arith.mulf %172, %171 : vector<8x64xf32>
    %174 = math.tanh %173 : vector<8x64xf32>
    %cst_69 = arith.constant 1.000000e+00 : f32
    %175 = vector.broadcast %cst_69 : f32 to vector<8x64xf32>
    %176 = arith.addf %175, %174 : vector<8x64xf32>
    %cst_70 = arith.constant 5.000000e-01 : f32
    %177 = vector.broadcast %cst_70 : f32 to vector<8x64xf32>
    %178 = arith.mulf %177, %176 : vector<8x64xf32>
    %179 = arith.mulf %166, %178 : vector<8x64xf32>
    %180 = arith.truncf %179 : vector<8x64xf32> to vector<8x64xbf16>
    %c0_71 = arith.constant 0 : index
    %c0_72 = arith.constant 0 : index
    %181 = vector.load %arg16[%c0_71, %c0_72] : memref<64x32xbf16, #tpu.memory_space<vmem>>, vector<64x32xbf16>
    %cst_73 = arith.constant dense<0.000000e+00> : vector<8x32xf32>
    %182 = tpu.matmul %180, %181, %cst_73 {dimension_numbers = #tpu.dot_dimension_numbers<[1], [0], [0], [1], [0, 0, 1, 1], [], []>} : vector<8x64xbf16>, vector<64x32xbf16>, vector<8x32xf32> -> vector<8x32xf32>
    %183 = arith.addf %182, %163 : vector<8x32xf32>
    %c0_74 = arith.constant 0 : index
    %c0_75 = arith.constant 0 : index
    %c0_76 = arith.constant 0 : index
    %184 = vector.load %arg17[%c0_74, %c0_75, %c0_76] : memref<1x8x32xf32, #tpu.memory_space<vmem>>, vector<1x8x32xf32>
    %185 = vector.shape_cast %184 : vector<1x8x32xf32> to vector<8x32xf32>
    %186 = vector.shape_cast %183 : vector<8x32xf32> to vector<1x8x32xf32>
    tpu.vector_store %arg17[%c0_74, %c0_75, %c0_76], %186 {strides = array<i32>} : memref<1x8x32xf32, #tpu.memory_space<vmem>>, vector<1x8x32xf32>,
    return
  }
  func.func @transform_0(%arg0: i32, %arg1: i32) -> (i32, i32, i32) {
    %c0_i32 = arith.constant 0 : i32
    %c0_i32_0 = arith.constant 0 : i32
    return %arg0, %arg1, %c0_i32 : i32, i32, i32
  }
  func.func @transform_1(%arg0: i32, %arg1: i32) -> (i32, i32, i32) {
    %c0_i32 = arith.constant 0 : i32
    %c0_i32_0 = arith.constant 0 : i32
    %c0_i32_1 = arith.constant 0 : i32
    return %arg0, %c0_i32, %c0_i32_0 : i32, i32, i32
  }
  func.func @transform_2(%arg0: i32, %arg1: i32) -> (i32, i32, i32) {
    %c0_i32 = arith.constant 0 : i32
    %c0_i32_0 = arith.constant 0 : i32
    %c0_i32_1 = arith.constant 0 : i32
    return %arg0, %c0_i32, %c0_i32_0 : i32, i32, i32
  }
  func.func @transform_3(%arg0: i32, %arg1: i32) -> (i32, i32) {
    %c0_i32 = arith.constant 0 : i32
    %c0_i32_0 = arith.constant 0 : i32
    %c0_i32_1 = arith.constant 0 : i32
    return %c0_i32, %c0_i32_0 : i32, i32
  }
  func.func @transform_4(%arg0: i32, %arg1: i32) -> (i32, i32) {
    %c0_i32 = arith.constant 0 : i32
    %c0_i32_0 = arith.constant 0 : i32
    %c0_i32_1 = arith.constant 0 : i32
    return %c0_i32, %c0_i32_0 : i32, i32
  }
  func.func @transform_5(%arg0: i32, %arg1: i32) -> (i32, i32) {
    %c0_i32 = arith.constant 0 : i32
    %c0_i32_0 = arith.constant 0 : i32
    %c0_i32_1 = arith.constant 0 : i32
    return %c0_i32, %c0_i32_0 : i32, i32
  }
  func.func @transform_6(%arg0: i32, %arg1: i32) -> (i32, i32) {
    %c0_i32 = arith.constant 0 : i32
    %c0_i32_0 = arith.constant 0 : i32
    %c0_i32_1 = arith.constant 0 : i32
    return %c0_i32, %c0_i32_0 : i32, i32
  }
  func.func @transform_7(%arg0: i32, %arg1: i32) -> (i32, i32) {
    %c0_i32 = arith.constant 0 : i32
    %c0_i32_0 = arith.constant 0 : i32
    %c0_i32_1 = arith.constant 0 : i32
    return %c0_i32, %c0_i32_0 : i32, i32
  }
  func.func @transform_8(%arg0: i32, %arg1: i32) -> (i32, i32) {
    %c0_i32 = arith.constant 0 : i32
    %c0_i32_0 = arith.constant 0 : i32
    %c0_i32_1 = arith.constant 0 : i32
    return %c0_i32, %c0_i32_0 : i32, i32
  }
  func.func @transform_9(%arg0: i32, %arg1: i32) -> (i32, i32) {
    %c0_i32 = arith.constant 0 : i32
    %c0_i32_0 = arith.constant 0 : i32
    %c0_i32_1 = arith.constant 0 : i32
    return %c0_i32, %c0_i32_0 : i32, i32
  }
  func.func @transform_10(%arg0: i32, %arg1: i32) -> (i32, i32) {
    %c0_i32 = arith.constant 0 : i32
    %c0_i32_0 = arith.constant 0 : i32
    %c0_i32_1 = arith.constant 0 : i32
    return %c0_i32, %c0_i32_0 : i32, i32
  }
  func.func @transform_11(%arg0: i32, %arg1: i32) -> (i32, i32) {
    %c0_i32 = arith.constant 0 : i32
    %c0_i32_0 = arith.constant 0 : i32
    %c0_i32_1 = arith.constant 0 : i32
    return %c0_i32, %c0_i32_0 : i32, i32
  }
  func.func @transform_12(%arg0: i32, %arg1: i32) -> (i32, i32) {
    %c0_i32 = arith.constant 0 : i32
    %c0_i32_0 = arith.constant 0 : i32
    %c0_i32_1 = arith.constant 0 : i32
    return %c0_i32, %c0_i32_0 : i32, i32
  }
  func.func @transform_13(%arg0: i32, %arg1: i32) -> (i32, i32) {
    %c0_i32 = arith.constant 0 : i32
    %c0_i32_0 = arith.constant 0 : i32
    %c0_i32_1 = arith.constant 0 : i32
    return %c0_i32, %c0_i32_0 : i32, i32
  }
  func.func @transform_14(%arg0: i32, %arg1: i32) -> (i32, i32) {
    %c0_i32 = arith.constant 0 : i32
    %c0_i32_0 = arith.constant 0 : i32
    %c0_i32_1 = arith.constant 0 : i32
    return %c0_i32, %c0_i32_0 : i32, i32
  }
  func.func @transform_15(%arg0: i32, %arg1: i32) -> (i32, i32, i32) {
    %c0_i32 = arith.constant 0 : i32
    %c0_i32_0 = arith.constant 0 : i32
    return %arg0, %arg1, %c0_i32 : i32, i32, i32
  }
}

</mosaic_0001>

<llo_original>
// kernel: tpu_custom_call.1
$region0: #{tpu_custom_call.1}
  #allocation0 [shape = 'u32[]', space=smem, size = 0x4, offset = 0x4, fixed_abs, tag = 'smem constant byte address 0x4 - core index']
  #allocation1 [shape = 'u32[144,128]{1,0:T(1,128)}', space=vmem, size = 0x12000, scoped, tag = 'internal scratch']
  #allocation2 [shape = 'f32[8,32]{1,0:T(8,128)}', space=vmem, size = 0x1000, scoped, tag = 'scratch operand']
  %s0 = inlined_call_operand.vmem [shape: f32[2,8,32], index: 0, kind: input, shape index: {}]
  %s1 = inlined_call_operand.vmem [shape: f32[2,8,32], index: 1, kind: input, shape index: {}]
  %s2 = inlined_call_operand.vmem [shape: f32[2,1,8], index: 2, kind: input, shape index: {}]
  %s3 = inlined_call_operand.vmem [shape: bf16[32,32], index: 3, kind: input, shape index: {}]
  %s4 = inlined_call_operand.hbm [shape: f32[1,32], index: 4, kind: input, shape index: {}]
  %s5 = inlined_call_operand.hbm [shape: bf16[32,64], index: 5, kind: input, shape index: {}]
  %s6 = inlined_call_operand.hbm [shape: f32[1,64], index: 6, kind: input, shape index: {}]
  %s7 = inlined_call_operand.hbm [shape: bf16[32,32], index: 7, kind: input, shape index: {}]
  %s8 = inlined_call_operand.hbm [shape: f32[1,32], index: 8, kind: input, shape index: {}]
  %s9 = inlined_call_operand.hbm [shape: f32[1,32], index: 9, kind: input, shape index: {}]
  %s10 = inlined_call_operand.vmem [shape: f32[1,32], index: 10, kind: input, shape index: {}]
  %s11 = inlined_call_operand.vmem [shape: f32[1,32], index: 11, kind: input, shape index: {}]
  %s12 = inlined_call_operand.vmem [shape: f32[1,32], index: 12, kind: input, shape index: {}]
  %s13 = inlined_call_operand.vmem [shape: bf16[32,64], index: 13, kind: input, shape index: {}]
  %s14 = inlined_call_operand.vmem [shape: bf16[64,32], index: 14, kind: input, shape index: {}]
  %s15 = inlined_call_operand.hbm [shape: f32[2,8,32], index: 15, kind: output, shape index: {}]
  %s16 = sld [smem:[#allocation0]]
  $region117: #{tpu_custom_call.1} parent=0
    _
  %s18 = ssub.s32 1, %s16
  %s19 = scalar_select 0, %s18, %s16
  $region1: #{tpu_custom_call.1} parent=0
    #allocation3 [shape = 'u8[512]{0}', space=vmem, size = 0x400, scoped, tag = 'input window, operand 4, single buffered']
    #allocation4 [shape = 's32[2]{0}', space=sflag, size = 0x8, scoped, tag = 'scoped memory for tpu_custom_call.1']
    #allocation5 [shape = 's32[2]{0}', space=sflag, size = 0x8, scoped, tag = 'scoped memory for tpu_custom_call.1']
    #allocation6 [shape = 'u8[8192]{0}', space=vmem, size = 0x2000, scoped, tag = 'input window, operand 5, single buffered']
    #allocation7 [shape = 's32[1]{0}', space=sflag, size = 0x4, scoped, tag = 'scoped memory for tpu_custom_call.1']
    #allocation8 [shape = 'u8[512]{0}', space=vmem, size = 0x400, scoped, tag = 'input window, operand 6, single buffered']
    #allocation9 [shape = 'u8[8192]{0}', space=vmem, size = 0x2000, scoped, tag = 'input window, operand 7, single buffered']
    #allocation10 [shape = 's32[1]{0}', space=sflag, size = 0x4, scoped, tag = 'scoped memory for tpu_custom_call.1']
    #allocation11 [shape = 'u8[512]{0}', space=vmem, size = 0x400, scoped, tag = 'input window, operand 8, single buffered']
    #allocation12 [shape = 'u8[512]{0}', space=vmem, size = 0x400, scoped, tag = 'input window, operand 9, single buffered']
    #allocation13 [shape = 's32[1]{0}', space=sflag, size = 0x4, scoped, tag = 'scoped memory for tpu_custom_call.1']
    #allocation14 [shape = 'u8[8192]{0}', space=vmem, size = 0x2000, scoped, tag = 'output window, operand 0']
    %20 = vsyncpa [#allocation4], 0
    %21 = vsyncpa [#allocation7], 0
    %22 = vsyncpa [#allocation10], 0
    %23 = vsyncpa [#allocation13], 0
    %24 = vsyncpa [#allocation5], 0
    %s25 = scalar_lea.sflag [#allocation5], 1
    %26 = vsyncpa %s25, 0
    loop: start=0, step=1, limit=4
    $region2: #{tpu_custom_call.1} parent=1 // loop_pre_header
      _
    $region3: #{tpu_custom_call.1} parent=1 // loop_header
      %s28 = sphi 0, %s32
      %p29 = scmp.ge.s32.totalorder %s28, 4
      %s35 = sphi 0, %s47
      %s36 = sphi 0, %s43
      %s37 = sphi 0, %s35
      %s38 = sphi 0, %s36
      %s39 = sphi 0, %s37
      %s40 = sphi 0, %s38
      %s52 = sphi 0, %s54
      %s55 = sphi 0, %s52
      %s56 = sphi 0, %s55
      %s72 = sphi 0, %s56
      %s78 = sphi 0, %s80
      %s81 = sphi 0, %s78
      %s82 = sphi 0, %s81
      %s98 = sphi 0, %s82
      %s104 = sphi 0, %s106
      %s107 = sphi 0, %s104
      %s108 = sphi 0, %s107
      %s124 = sphi 0, %s108
      %s128 = sphi 0, %s128
      %s130 = sphi 0, %s128
      %s131 = sphi 0, %s130
      %s145 = sphi 0, %s131
      %s149 = sphi 0, %s149
      %s151 = sphi 0, %s149
      %s152 = sphi 0, %s151
      %s166 = sphi 0, %s152
      %s170 = sphi 0, %s170
      %s172 = sphi 0, %s170
      %s173 = sphi 0, %s172
      %s187 = sphi 0, %s173
      %s191 = sphi 0, %s191
      %s193 = sphi 0, %s191
      %s194 = sphi 0, %s193
      %s208 = sphi 0, %s194
      %s212 = sphi 0, %s212
      %s214 = sphi 0, %s212
      %s215 = sphi 0, %s214
      %s229 = sphi 0, %s215
      %s233 = sphi 0, %s233
      %s235 = sphi 0, %s233
      %s236 = sphi 0, %s235
      %s250 = sphi 0, %s236
      %s254 = sphi 0, %s254
      %s256 = sphi 0, %s254
      %s257 = sphi 0, %s256
      %s271 = sphi 0, %s257
      %s275 = sphi 0, %s275
      %s277 = sphi 0, %s275
      %s278 = sphi 0, %s277
      %s292 = sphi 0, %s278
      %s296 = sphi 0, %s296
      %s298 = sphi 0, %s296
      %s299 = sphi 0, %s298
      %s313 = sphi 0, %s299
      %s317 = sphi 0, %s317
      %s319 = sphi 0, %s317
      %s320 = sphi 0, %s319
      %s334 = sphi 0, %s320
      %s338 = sphi 0, %s338
      %s340 = sphi 0, %s338
      %s341 = sphi 0, %s340
      %s355 = sphi 0, %s341
      %s359 = sphi 0, %s359
      %s361 = sphi 0, %s359
      %s362 = sphi 0, %s361
      %s376 = sphi 0, %s362
      %s384 = sphi 0, %s386
      %s387 = sphi 0, %s384
      %s388 = sphi 0, %s387
      %s404 = sphi 0, %s388
    $region4: #{tpu_custom_call.1} parent=1 // loop_header_branch
      %31 = sbr.rel (%p29) target = $region8
    $region5: #{tpu_custom_call.1} parent=1 // loop_body
      %s33 = ssub.s32 %s28, 1
      %s34 = ssub.s32 %s28, 2
      %s41 = sadd.s32 1, %s36
      %p42 = scmp.ge.s32.totalorder %s41, 1
      %s43 = scalar_select %p42, 0, %s41
      %s44 = sadd.s32 1, %s35
      %s45 = scalar_select %p42, %s44, %s35
      %p46 = scmp.ge.s32.totalorder %s45, 2
      %s47 = scalar_select %p46, 0, %s45
      %s48 = ssub.s32 %s35, %s47
      %s49 = ssub.s32 %s36, %s43
      %s50 = sor.u32 %s48, %s49
      %p51 = scmp.eq.s32.totalorder %s50, 0
      %s53 = sadd.s32 %s52, 1
      %s54 = scalar_select %p51, %s52, %s53
      %p57 = pneg %p51
      %p58 = scmp.eq.s32.totalorder %s28, 1
      %p59 = por %p57, %p58
      %p60 = scmp.ne.s32.totalorder %s52, %s55
      %p61 = scmp.eq.s32.totalorder %s28, 0
      %p62 = por %p60, %p61
      %p63 = scmp.ne.s32.totalorder %s52, %s55
      %p64 = scmp.eq.s32.totalorder %s33, 1
      %p65 = por %p63, %p64
      %p66 = scmp.ne.s32.totalorder %s55, %s56
      %p67 = scmp.eq.s32.totalorder %s33, 0
      %p68 = por %p66, %p67
      %p69 = scmp.ne.s32.totalorder %s55, %s56
      %p70 = scmp.eq.s32.totalorder %s34, 1
      %p71 = por %p69, %p70
      %p73 = scmp.ne.s32.totalorder %s56, %s72
      %p74 = scmp.eq.s32.totalorder %s34, 0
      %p75 = por %p73, %p74
      %s76 = ssub.s32 %s35, %s47
      %p77 = scmp.eq.s32.totalorder %s76, 0
      %s79 = sadd.s32 %s78, 1
      %s80 = scalar_select %p77, %s78, %s79
      %p83 = pneg %p77
      %p84 = scmp.eq.s32.totalorder %s28, 1
      %p85 = por %p83, %p84
      %p86 = scmp.ne.s32.totalorder %s78, %s81
      %p87 = scmp.eq.s32.totalorder %s28, 0
      %p88 = por %p86, %p87
      %p89 = scmp.ne.s32.totalorder %s78, %s81
      %p90 = scmp.eq.s32.totalorder %s33, 1
      %p91 = por %p89, %p90
      %p92 = scmp.ne.s32.totalorder %s81, %s82
      %p93 = scmp.eq.s32.totalorder %s33, 0
      %p94 = por %p92, %p93
      %p95 = scmp.ne.s32.totalorder %s81, %s82
      %p96 = scmp.eq.s32.totalorder %s34, 1
      %p97 = por %p95, %p96
      %p99 = scmp.ne.s32.totalorder %s82, %s98
      %p100 = scmp.eq.s32.totalorder %s34, 0
      %p101 = por %p99, %p100
      %s102 = ssub.s32 %s35, %s47
      %p103 = scmp.eq.s32.totalorder %s102, 0
      %s105 = sadd.s32 %s104, 1
      %s106 = scalar_select %p103, %s104, %s105
      %p109 = pneg %p103
      %p110 = scmp.eq.s32.totalorder %s28, 1
      %p111 = por %p109, %p110
      %p112 = scmp.ne.s32.totalorder %s104, %s107
      %p113 = scmp.eq.s32.totalorder %s28, 0
      %p114 = por %p112, %p113
      %p115 = scmp.ne.s32.totalorder %s104, %s107
      %p116 = scmp.eq.s32.totalorder %s33, 1
      %p117 = por %p115, %p116
      %p118 = scmp.ne.s32.totalorder %s107, %s108
      %p119 = scmp.eq.s32.totalorder %s33, 0
      %p120 = por %p118, %p119
      %p121 = scmp.ne.s32.totalorder %s107, %s108
      %p122 = scmp.eq.s32.totalorder %s34, 1
      %p123 = por %p121, %p122
      %p125 = scmp.ne.s32.totalorder %s108, %s124
      %p126 = scmp.eq.s32.totalorder %s34, 0
      %p127 = por %p125, %p126
      %s129 = sadd.s32 %s128, 1
      %p132 = scmp.eq.s32.totalorder %s28, 1
      %p133 = scmp.ne.s32.totalorder %s128, %s130
      %p134 = scmp.eq.s32.totalorder %s28, 0
      %p135 = por %p133, %p134
      %p136 = scmp.ne.s32.totalorder %s128, %s130
      %p137 = scmp.eq.s32.totalorder %s33, 1
      %p138 = por %p136, %p137
      %p139 = scmp.ne.s32.totalorder %s130, %s131
      %p140 = scmp.eq.s32.totalorder %s33, 0
      %p141 = por %p139, %p140
      %p142 = scmp.ne.s32.totalorder %s130, %s131
      %p143 = scmp.eq.s32.totalorder %s34, 1
      %p144 = por %p142, %p143
      %p146 = scmp.ne.s32.totalorder %s131, %s145
      %p147 = scmp.eq.s32.totalorder %s34, 0
      %p148 = por %p146, %p147
      %s150 = sadd.s32 %s149, 1
      %p153 = scmp.eq.s32.totalorder %s28, 1
      %p154 = scmp.ne.s32.totalorder %s149, %s151
      %p155 = scmp.eq.s32.totalorder %s28, 0
      %p156 = por %p154, %p155
      %p157 = scmp.ne.s32.totalorder %s149, %s151
      %p158 = scmp.eq.s32.totalorder %s33, 1
      %p159 = por %p157, %p158
      %p160 = scmp.ne.s32.totalorder %s151, %s152
      %p161 = scmp.eq.s32.totalorder %s33, 0
      %p162 = por %p160, %p161
      %p163 = scmp.ne.s32.totalorder %s151, %s152
      %p164 = scmp.eq.s32.totalorder %s34, 1
      %p165 = por %p163, %p164
      %p167 = scmp.ne.s32.totalorder %s152, %s166
      %p168 = scmp.eq.s32.totalorder %s34, 0
      %p169 = por %p167, %p168
      %s171 = sadd.s32 %s170, 1
      %p174 = scmp.eq.s32.totalorder %s28, 1
      %p175 = scmp.ne.s32.totalorder %s170, %s172
      %p176 = scmp.eq.s32.totalorder %s28, 0
      %p177 = por %p175, %p176
      %p178 = scmp.ne.s32.totalorder %s170, %s172
      %p179 = scmp.eq.s32.totalorder %s33, 1
      %p180 = por %p178, %p179
      %p181 = scmp.ne.s32.totalorder %s172, %s173
      %p182 = scmp.eq.s32.totalorder %s33, 0
      %p183 = por %p181, %p182
      %p184 = scmp.ne.s32.totalorder %s172, %s173
      %p185 = scmp.eq.s32.totalorder %s34, 1
      %p186 = por %p184, %p185
      %p188 = scmp.ne.s32.totalorder %s173, %s187
      %p189 = scmp.eq.s32.totalorder %s34, 0
      %p190 = por %p188, %p189
      %s192 = sadd.s32 %s191, 1
      %p195 = scmp.eq.s32.totalorder %s28, 1
      %p196 = scmp.ne.s32.totalorder %s191, %s193
      %p197 = scmp.eq.s32.totalorder %s28, 0
      %p198 = por %p196, %p197
      %p199 = scmp.ne.s32.totalorder %s191, %s193
      %p200 = scmp.eq.s32.totalorder %s33, 1
      %p201 = por %p199, %p200
      %p202 = scmp.ne.s32.totalorder %s193, %s194
      %p203 = scmp.eq.s32.totalorder %s33, 0
      %p204 = por %p202, %p203
      %p205 = scmp.ne.s32.totalorder %s193, %s194
      %p206 = scmp.eq.s32.totalorder %s34, 1
      %p207 = por %p205, %p206
      %p209 = scmp.ne.s32.totalorder %s194, %s208
      %p210 = scmp.eq.s32.totalorder %s34, 0
      %p211 = por %p209, %p210
      %s213 = sadd.s32 %s212, 1
      %p216 = scmp.eq.s32.totalorder %s28, 1
      %p217 = scmp.ne.s32.totalorder %s212, %s214
      %p218 = scmp.eq.s32.totalorder %s28, 0
      %p219 = por %p217, %p218
      %p220 = scmp.ne.s32.totalorder %s212, %s214
      %p221 = scmp.eq.s32.totalorder %s33, 1
      %p222 = por %p220, %p221
      %p223 = scmp.ne.s32.totalorder %s214, %s215
      %p224 = scmp.eq.s32.totalorder %s33, 0
      %p225 = por %p223, %p224
      %p226 = scmp.ne.s32.totalorder %s214, %s215
      %p227 = scmp.eq.s32.totalorder %s34, 1
      %p228 = por %p226, %p227
      %p230 = scmp.ne.s32.totalorder %s215, %s229
      %p231 = scmp.eq.s32.totalorder %s34, 0
      %p232 = por %p230, %p231
      %s234 = sadd.s32 %s233, 1
      %p237 = scmp.eq.s32.totalorder %s28, 1
      %p238 = scmp.ne.s32.totalorder %s233, %s235
      %p239 = scmp.eq.s32.totalorder %s28, 0
      %p240 = por %p238, %p239
      %p241 = scmp.ne.s32.totalorder %s233, %s235
      %p242 = scmp.eq.s32.totalorder %s33, 1
      %p243 = por %p241, %p242
      %p244 = scmp.ne.s32.totalorder %s235, %s236
      %p245 = scmp.eq.s32.totalorder %s33, 0
      %p246 = por %p244, %p245
      %p247 = scmp.ne.s32.totalorder %s235, %s236
      %p248 = scmp.eq.s32.totalorder %s34, 1
      %p249 = por %p247, %p248
      %p251 = scmp.ne.s32.totalorder %s236, %s250
      %p252 = scmp.eq.s32.totalorder %s34, 0
      %p253 = por %p251, %p252
      %s255 = sadd.s32 %s254, 1
      %p258 = scmp.eq.s32.totalorder %s28, 1
      %p259 = scmp.ne.s32.totalorder %s254, %s256
      %p260 = scmp.eq.s32.totalorder %s28, 0
      %p261 = por %p259, %p260
      %p262 = scmp.ne.s32.totalorder %s254, %s256
      %p263 = scmp.eq.s32.totalorder %s33, 1
      %p264 = por %p262, %p263
      %p265 = scmp.ne.s32.totalorder %s256, %s257
      %p266 = scmp.eq.s32.totalorder %s33, 0
      %p267 = por %p265, %p266
      %p268 = scmp.ne.s32.totalorder %s256, %s257
      %p269 = scmp.eq.s32.totalorder %s34, 1
      %p270 = por %p268, %p269
      %p272 = scmp.ne.s32.totalorder %s257, %s271
      %p273 = scmp.eq.s32.totalorder %s34, 0
      %p274 = por %p272, %p273
      %s276 = sadd.s32 %s275, 1
      %p279 = scmp.eq.s32.totalorder %s28, 1
      %p280 = scmp.ne.s32.totalorder %s275, %s277
      %p281 = scmp.eq.s32.totalorder %s28, 0
      %p282 = por %p280, %p281
      %p283 = scmp.ne.s32.totalorder %s275, %s277
      %p284 = scmp.eq.s32.totalorder %s33, 1
      %p285 = por %p283, %p284
      %p286 = scmp.ne.s32.totalorder %s277, %s278
      %p287 = scmp.eq.s32.totalorder %s33, 0
      %p288 = por %p286, %p287
      %p289 = scmp.ne.s32.totalorder %s277, %s278
      %p290 = scmp.eq.s32.totalorder %s34, 1
      %p291 = por %p289, %p290
      %p293 = scmp.ne.s32.totalorder %s278, %s292
      %p294 = scmp.eq.s32.totalorder %s34, 0
      %p295 = por %p293, %p294
      %s297 = sadd.s32 %s296, 1
      %p300 = scmp.eq.s32.totalorder %s28, 1
      %p301 = scmp.ne.s32.totalorder %s296, %s298
      %p302 = scmp.eq.s32.totalorder %s28, 0
      %p303 = por %p301, %p302
      %p304 = scmp.ne.s32.totalorder %s296, %s298
      %p305 = scmp.eq.s32.totalorder %s33, 1
      %p306 = por %p304, %p305
      %p307 = scmp.ne.s32.totalorder %s298, %s299
      %p308 = scmp.eq.s32.totalorder %s33, 0
      %p309 = por %p307, %p308
      %p310 = scmp.ne.s32.totalorder %s298, %s299
      %p311 = scmp.eq.s32.totalorder %s34, 1
      %p312 = por %p310, %p311
      %p314 = scmp.ne.s32.totalorder %s299, %s313
      %p315 = scmp.eq.s32.totalorder %s34, 0
      %p316 = por %p314, %p315
      %s318 = sadd.s32 %s317, 1
      %p321 = scmp.eq.s32.totalorder %s28, 1
      %p322 = scmp.ne.s32.totalorder %s317, %s319
      %p323 = scmp.eq.s32.totalorder %s28, 0
      %p324 = por %p322, %p323
      %p325 = scmp.ne.s32.totalorder %s317, %s319
      %p326 = scmp.eq.s32.totalorder %s33, 1
      %p327 = por %p325, %p326
      %p328 = scmp.ne.s32.totalorder %s319, %s320
      %p329 = scmp.eq.s32.totalorder %s33, 0
      %p330 = por %p328, %p329
      %p331 = scmp.ne.s32.totalorder %s319, %s320
      %p332 = scmp.eq.s32.totalorder %s34, 1
      %p333 = por %p331, %p332
      %p335 = scmp.ne.s32.totalorder %s320, %s334
      %p336 = scmp.eq.s32.totalorder %s34, 0
      %p337 = por %p335, %p336
      %s339 = sadd.s32 %s338, 1
      %p342 = scmp.eq.s32.totalorder %s28, 1
      %p343 = scmp.ne.s32.totalorder %s338, %s340
      %p344 = scmp.eq.s32.totalorder %s28, 0
      %p345 = por %p343, %p344
      %p346 = scmp.ne.s32.totalorder %s338, %s340
      %p347 = scmp.eq.s32.totalorder %s33, 1
      %p348 = por %p346, %p347
      %p349 = scmp.ne.s32.totalorder %s340, %s341
      %p350 = scmp.eq.s32.totalorder %s33, 0
      %p351 = por %p349, %p350
      %p352 = scmp.ne.s32.totalorder %s340, %s341
      %p353 = scmp.eq.s32.totalorder %s34, 1
      %p354 = por %p352, %p353
      %p356 = scmp.ne.s32.totalorder %s341, %s355
      %p357 = scmp.eq.s32.totalorder %s34, 0
      %p358 = por %p356, %p357
      %s360 = sadd.s32 %s359, 1
      %p363 = scmp.eq.s32.totalorder %s28, 1
      %p364 = scmp.ne.s32.totalorder %s359, %s361
      %p365 = scmp.eq.s32.totalorder %s28, 0
      %p366 = por %p364, %p365
      %p367 = scmp.ne.s32.totalorder %s359, %s361
      %p368 = scmp.eq.s32.totalorder %s33, 1
      %p369 = por %p367, %p368
      %p370 = scmp.ne.s32.totalorder %s361, %s362
      %p371 = scmp.eq.s32.totalorder %s33, 0
      %p372 = por %p370, %p371
      %p373 = scmp.ne.s32.totalorder %s361, %s362
      %p374 = scmp.eq.s32.totalorder %s34, 1
      %p375 = por %p373, %p374
      %p377 = scmp.ne.s32.totalorder %s362, %s376
      %p378 = scmp.eq.s32.totalorder %s34, 0
      %p379 = por %p377, %p378
      %s380 = ssub.s32 %s35, %s47
      %s381 = ssub.s32 %s36, %s43
      %s382 = sor.u32 %s380, %s381
      %p383 = scmp.eq.s32.totalorder %s382, 0
      %s385 = sadd.s32 %s384, 1
      %s386 = scalar_select %p383, %s384, %s385
      %p389 = pneg %p383
      %p390 = scmp.eq.s32.totalorder %s28, 1
      %p391 = por %p389, %p390
      %p392 = scmp.ne.s32.totalorder %s384, %s387
      %p393 = scmp.eq.s32.totalorder %s28, 0
      %p394 = por %p392, %p393
      %p395 = scmp.ne.s32.totalorder %s384, %s387
      %p396 = scmp.eq.s32.totalorder %s33, 1
      %p397 = por %p395, %p396
      %p398 = scmp.ne.s32.totalorder %s387, %s388
      %p399 = scmp.eq.s32.totalorder %s33, 0
      %p400 = por %p398, %p399
      %p401 = scmp.ne.s32.totalorder %s387, %s388
      %p402 = scmp.eq.s32.totalorder %s34, 1
      %p403 = por %p401, %p402
      %p405 = scmp.ne.s32.totalorder %s388, %s404
      %p406 = scmp.eq.s32.totalorder %s34, 0
      %p407 = por %p405, %p406
      %p408 = scmp.le.s32.totalorder 1, %s28
      %p409 = scmp.lt.s32.totalorder %s28, 3
      %p410 = pnand %p408, %p409
      %p411 = pneg %p410
      // Predicated region
      $region9: #{tpu_custom_call.1} parent=5 // pred_check
        _
      $region10: #{tpu_custom_call.1} parent=5 // pred_check_branch
        %413 = sbr.rel (%p410) target = $region12
      $region11: #{tpu_custom_call.1} parent=5 // pred_region
        %s414 = ssub.s32 %s28, 1
        // Predicated region
        $region13: #{tpu_custom_call.1} parent=11 // pred_check
          %p415 = pneg %p141
        $region14: #{tpu_custom_call.1} parent=11 // pred_check_branch
          %417 = sbr.rel (%p415) target = $region16
        $region15: #{tpu_custom_call.1} parent=11 // pred_region
          _
        $region16: #{tpu_custom_call.1} parent=11 // pred_fallthru
          _
        // Predicated region
        $region17: #{tpu_custom_call.1} parent=11 // pred_check
          %p418 = pneg %p162
        $region18: #{tpu_custom_call.1} parent=11 // pred_check_branch
          %420 = sbr.rel (%p418) target = $region20
        $region19: #{tpu_custom_call.1} parent=11 // pred_region
          %s422 = ssub.s32 16, 16
          %423 = vsyncadd [#allocation4], %s422
          %s425 = sshll.u32 [#allocation3], 4
          %s426 = int_to_ptr.vmem [resolvable:$true] %s425
          %428 = dma.hbm_to_vmem [thread:$0]  %s4, 16, %s426, [#allocation4]
        $region20: #{tpu_custom_call.1} parent=11 // pred_fallthru
          _
        // Predicated region
        $region21: #{tpu_custom_call.1} parent=11 // pred_check
          %p429 = pneg %p183
        $region22: #{tpu_custom_call.1} parent=11 // pred_check_branch
          %431 = sbr.rel (%p429) target = $region24
        $region23: #{tpu_custom_call.1} parent=11 // pred_region
          %s433 = ssub.s32 256, 256
          %434 = vsyncadd [#allocation7], %s433
          %s435 = sshll.u32 [#allocation6], 4
          %s436 = int_to_ptr.vmem [resolvable:$true] %s435
          %441 = dma.hbm_to_vmem [thread:$0]  %s5, 256, %s436, [#allocation7], 64, 64, 4
        $region24: #{tpu_custom_call.1} parent=11 // pred_fallthru
          _
        // Predicated region
        $region25: #{tpu_custom_call.1} parent=11 // pred_check
          %p442 = pneg %p204
        $region26: #{tpu_custom_call.1} parent=11 // pred_check_branch
          %444 = sbr.rel (%p442) target = $region28
        $region27: #{tpu_custom_call.1} parent=11 // pred_region
          %s446 = ssub.s32 16, 16
          %447 = vsyncadd [#allocation7], %s446
          %s449 = sshll.u32 [#allocation8], 4
          %s450 = int_to_ptr.vmem [resolvable:$true] %s449
          %452 = dma.hbm_to_vmem [thread:$0]  %s6, 16, %s450, [#allocation7]
        $region28: #{tpu_custom_call.1} parent=11 // pred_fallthru
          _
        // Predicated region
        $region29: #{tpu_custom_call.1} parent=11 // pred_check
          %p453 = pneg %p225
        $region30: #{tpu_custom_call.1} parent=11 // pred_check_branch
          %455 = sbr.rel (%p453) target = $region32
        $region31: #{tpu_custom_call.1} parent=11 // pred_region
          %s457 = ssub.s32 256, 256
          %458 = vsyncadd [#allocation10], %s457
          %s459 = sshll.u32 [#allocation9], 4
          %s460 = int_to_ptr.vmem [resolvable:$true] %s459
          %465 = dma.hbm_to_vmem [thread:$0]  %s7, 256, %s460, [#allocation10], 64, 64, 4
        $region32: #{tpu_custom_call.1} parent=11 // pred_fallthru
          _
        // Predicated region
        $region33: #{tpu_custom_call.1} parent=11 // pred_check
          %p466 = pneg %p246
        $region34: #{tpu_custom_call.1} parent=11 // pred_check_branch
          %468 = sbr.rel (%p466) target = $region36
        $region35: #{tpu_custom_call.1} parent=11 // pred_region
          %s470 = ssub.s32 16, 16
          %471 = vsyncadd [#allocation10], %s470
          %s473 = sshll.u32 [#allocation11], 4
          %s474 = int_to_ptr.vmem [resolvable:$true] %s473
          %476 = dma.hbm_to_vmem [thread:$0]  %s8, 16, %s474, [#allocation10]
        $region36: #{tpu_custom_call.1} parent=11 // pred_fallthru
          _
        // Predicated region
        $region37: #{tpu_custom_call.1} parent=11 // pred_check
          %p477 = pneg %p267
        $region38: #{tpu_custom_call.1} parent=11 // pred_check_branch
          %479 = sbr.rel (%p477) target = $region40
        $region39: #{tpu_custom_call.1} parent=11 // pred_region
          %s481 = ssub.s32 16, 16
          %482 = vsyncadd [#allocation13], %s481
          %s484 = sshll.u32 [#allocation12], 4
          %s485 = int_to_ptr.vmem [resolvable:$true] %s484
          %487 = dma.hbm_to_vmem [thread:$0]  %s9, 16, %s485, [#allocation13]
        $region40: #{tpu_custom_call.1} parent=11 // pred_fallthru
          _
        // Predicated region
        $region41: #{tpu_custom_call.1} parent=11 // pred_check
          %p488 = pneg %p288
        $region42: #{tpu_custom_call.1} parent=11 // pred_check_branch
          %490 = sbr.rel (%p488) target = $region44
        $region43: #{tpu_custom_call.1} parent=11 // pred_region
          _
        $region44: #{tpu_custom_call.1} parent=11 // pred_fallthru
          _
        // Predicated region
        $region45: #{tpu_custom_call.1} parent=11 // pred_check
          %p491 = pneg %p309
        $region46: #{tpu_custom_call.1} parent=11 // pred_check_branch
          %493 = sbr.rel (%p491) target = $region48
        $region47: #{tpu_custom_call.1} parent=11 // pred_region
          _
        $region48: #{tpu_custom_call.1} parent=11 // pred_fallthru
          _
        // Predicated region
        $region49: #{tpu_custom_call.1} parent=11 // pred_check
          %p494 = pneg %p330
        $region50: #{tpu_custom_call.1} parent=11 // pred_check_branch
          %496 = sbr.rel (%p494) target = $region52
        $region51: #{tpu_custom_call.1} parent=11 // pred_region
          _
        $region52: #{tpu_custom_call.1} parent=11 // pred_fallthru
          _
        // Predicated region
        $region53: #{tpu_custom_call.1} parent=11 // pred_check
          %p497 = pneg %p351
        $region54: #{tpu_custom_call.1} parent=11 // pred_check_branch
          %499 = sbr.rel (%p497) target = $region56
        $region55: #{tpu_custom_call.1} parent=11 // pred_region
          _
        $region56: #{tpu_custom_call.1} parent=11 // pred_fallthru
          _
        // Predicated region
        $region57: #{tpu_custom_call.1} parent=11 // pred_check
          %p500 = pneg %p372
        $region58: #{tpu_custom_call.1} parent=11 // pred_check_branch
          %502 = sbr.rel (%p500) target = $region60
        $region59: #{tpu_custom_call.1} parent=11 // pred_region
          _
        $region60: #{tpu_custom_call.1} parent=11 // pred_fallthru
          _
      $region12: #{tpu_custom_call.1} parent=5 // pred_fallthru
        _
      %p503 = scmp.lt.s32.totalorder %s28, 2
      // Predicated region
      $region61: #{tpu_custom_call.1} parent=5 // pred_check
        %p504 = pneg %p503
      $region62: #{tpu_custom_call.1} parent=5 // pred_check_branch
        %506 = sbr.rel (%p504) target = $region64
      $region63: #{tpu_custom_call.1} parent=5 // pred_region
        // Predicated region
        $region65: #{tpu_custom_call.1} parent=63 // pred_check
          %p507 = pneg %p62
        $region66: #{tpu_custom_call.1} parent=63 // pred_check_branch
          %509 = sbr.rel (%p507) target = $region68
        $region67: #{tpu_custom_call.1} parent=63 // pred_region
          %p510 = scmp.lt.s32.totalorder %s35, 1
          %s511 = scalar_select %p510, %s35, 1
          %p512 = scmp.lt.s32.totalorder %s36, 0
          %s513 = scalar_select %p512, %s36, 0
          %s514 = sadd.s32 %s513, %s511
          %s515 = smul.addr %s514, 8
          %s516 = scalar_lea.vmem %s0, %s515
        $region68: #{tpu_custom_call.1} parent=63 // pred_fallthru
          _
        // Predicated region
        $region69: #{tpu_custom_call.1} parent=63 // pred_check
          %p517 = pneg %p88
        $region70: #{tpu_custom_call.1} parent=63 // pred_check_branch
          %519 = sbr.rel (%p517) target = $region72
        $region71: #{tpu_custom_call.1} parent=63 // pred_region
          %p520 = scmp.lt.s32.totalorder %s35, 1
          %s521 = scalar_select %p520, %s35, 1
          %s522 = smul.addr %s521, 8
          %s523 = scalar_lea.vmem %s1, %s522
        $region72: #{tpu_custom_call.1} parent=63 // pred_fallthru
          _
        // Predicated region
        $region73: #{tpu_custom_call.1} parent=63 // pred_check
          %p524 = pneg %p114
        $region74: #{tpu_custom_call.1} parent=63 // pred_check_branch
          %526 = sbr.rel (%p524) target = $region76
        $region75: #{tpu_custom_call.1} parent=63 // pred_region
          %p527 = scmp.lt.s32.totalorder %s35, 1
          %s528 = scalar_select %p527, %s35, 1
          %s529 = scalar_lea.vmem %s2, %s528
        $region76: #{tpu_custom_call.1} parent=63 // pred_fallthru
          _
      $region64: #{tpu_custom_call.1} parent=5 // pred_fallthru
        _
      %p530 = scmp.le.s32.totalorder 1, %s28
      %p531 = scmp.lt.s32.totalorder %s28, 3
      %p532 = pnand %p530, %p531
      %p533 = pneg %p532
      // Predicated region
      $region77: #{tpu_custom_call.1} parent=5 // pred_check
        _
      $region78: #{tpu_custom_call.1} parent=5 // pred_check_branch
        %535 = sbr.rel (%p532) target = $region80
      $region79: #{tpu_custom_call.1} parent=5 // pred_region
        %s536 = ssub.s32 %s28, 1
        // Predicated region
        $region81: #{tpu_custom_call.1} parent=79 // pred_check
          %p537 = pneg %p162
        $region82: #{tpu_custom_call.1} parent=79 // pred_check_branch
          %539 = sbr.rel (%p537) target = $region84
        $region83: #{tpu_custom_call.1} parent=79 // pred_region
          %540 = dma.done [#allocation4], 16
        $region84: #{tpu_custom_call.1} parent=79 // pred_fallthru
          _
        // Predicated region
        $region85: #{tpu_custom_call.1} parent=79 // pred_check
          %p541 = pneg %p183
        $region86: #{tpu_custom_call.1} parent=79 // pred_check_branch
          %543 = sbr.rel (%p541) target = $region88
        $region87: #{tpu_custom_call.1} parent=79 // pred_region
          %544 = dma.done [#allocation7], 256
        $region88: #{tpu_custom_call.1} parent=79 // pred_fallthru
          _
        // Predicated region
        $region89: #{tpu_custom_call.1} parent=79 // pred_check
          %p545 = pneg %p204
        $region90: #{tpu_custom_call.1} parent=79 // pred_check_branch
          %547 = sbr.rel (%p545) target = $region92
        $region91: #{tpu_custom_call.1} parent=79 // pred_region
          %548 = dma.done [#allocation7], 16
        $region92: #{tpu_custom_call.1} parent=79 // pred_fallthru
          _
        // Predicated region
        $region93: #{tpu_custom_call.1} parent=79 // pred_check
          %p549 = pneg %p225
        $region94: #{tpu_custom_call.1} parent=79 // pred_check_branch
          %551 = sbr.rel (%p549) target = $region96
        $region95: #{tpu_custom_call.1} parent=79 // pred_region
          %552 = dma.done [#allocation10], 256
        $region96: #{tpu_custom_call.1} parent=79 // pred_fallthru
          _
        // Predicated region
        $region97: #{tpu_custom_call.1} parent=79 // pred_check
          %p553 = pneg %p246
        $region98: #{tpu_custom_call.1} parent=79 // pred_check_branch
          %555 = sbr.rel (%p553) target = $region100
        $region99: #{tpu_custom_call.1} parent=79 // pred_region
          %556 = dma.done [#allocation10], 16
        $region100: #{tpu_custom_call.1} parent=79 // pred_fallthru
          _
        // Predicated region
        $region101: #{tpu_custom_call.1} parent=79 // pred_check
          %p557 = pneg %p267
        $region102: #{tpu_custom_call.1} parent=79 // pred_check_branch
          %559 = sbr.rel (%p557) target = $region104
        $region103: #{tpu_custom_call.1} parent=79 // pred_region
          %560 = dma.done [#allocation13], 16
        $region104: #{tpu_custom_call.1} parent=79 // pred_fallthru
          _
        %p561 = scmp.lt.s32.totalorder %s37, 1
        %s562 = scalar_select %p561, %s37, 1
        %p563 = scmp.lt.s32.totalorder %s38, 0
        %s564 = scalar_select %p563, %s38, 0
        %s565 = sadd.s32 %s564, %s562
        %s566 = smul.addr %s565, 8
        %s567 = scalar_lea.vmem %s0, %s566
        %p568 = pneg %p68
        %p569 = pneg %p65
        %p570 = scmp.lt.s32.totalorder %s37, 1
        %s571 = scalar_select %p570, %s37, 1
        %s572 = smul.addr %s571, 8
        %s573 = scalar_lea.vmem %s1, %s572
        %p574 = pneg %p94
        %p575 = pneg %p91
        %p576 = scmp.lt.s32.totalorder %s37, 1
        %s577 = scalar_select %p576, %s37, 1
        %s578 = scalar_lea.vmem %s2, %s577
        %p579 = pneg %p120
        %p580 = pneg %p117
        %p581 = pneg %p141
        %p582 = pneg %p138
        %p583 = pneg %p162
        %p584 = pneg %p159
        %p585 = pneg %p183
        %p586 = pneg %p180
        %p587 = pneg %p204
        %p588 = pneg %p201
        %p589 = pneg %p225
        %p590 = pneg %p222
        %p591 = pneg %p246
        %p592 = pneg %p243
        %p593 = pneg %p267
        %p594 = pneg %p264
        %p595 = pneg %p288
        %p596 = pneg %p285
        %p597 = pneg %p309
        %p598 = pneg %p306
        %p599 = pneg %p330
        %p600 = pneg %p327
        %p601 = pneg %p351
        %p602 = pneg %p348
        %p603 = pneg %p372
        %p604 = pneg %p369
        %p605 = pneg %p400
        %p606 = pneg %p397
        %s607 = sand.u32 %s387, 1
        %s608 = scalar_lea.sflag [#allocation5], %s607
        %s609 = sand.u32 %s387, 1
        %s610 = smul.addr %s609, 8
        %s611 = scalar_lea.vmem [#allocation14], %s610
        %p612 = scmp.lt.s32.totalorder %s37, 1
        %s613 = scalar_select %p612, %s37, 1
        %p614 = scmp.lt.s32.totalorder %s38, 0
        %s615 = scalar_select %p614, %s38, 0
        %s616 = sadd.s32 %s615, %s613
        %s617 = smul.addr %s616, 8
        %s618 = scalar_lea.vmem %s0, %s617
        %p619 = scmp.lt.s32.totalorder %s37, 1
        %s620 = scalar_select %p619, %s37, 1
        %s621 = smul.addr %s620, 8
        %s622 = scalar_lea.vmem %s1, %s621
        %p623 = scmp.lt.s32.totalorder %s37, 1
        %s624 = scalar_select %p623, %s37, 1
        %s625 = scalar_lea.vmem %s2, %s624
        %v627 = vld [vmem:[%s618] sm:$0xff]
        %v628 = vld [vmem:[%s622] sm:$0xff]
        %v629 = vpack.c.bf16 %v627, %v627
        %v630 = vld [vmem:[%s3] sm:$0xf]
        %v631 = vld [vmem:[%s3 + $0x4] sm:$0xf]
        %v632 = vld [vmem:[%s3 + $0x8] sm:$0xf]
        %v633 = vld [vmem:[%s3 + $0xc] sm:$0xf]
        %v634 = vld [vmem:[#allocation3] sm:$0x1]
        %v636 = vlaneseq
        %v637 = vshrl.u32 %v636, 7
        %v638 = vsub.s32 0, %v637
        %v639 = vrot.slane %v634, %v638
        %v645 = vunpack.c.l.b16 %v630
        %v646 = vunpack.c.l.b16 %v631
        %v647 = vunpack.c.l.b16 %v632
        %v648 = vunpack.c.l.b16 %v633
        %v649 = vpack.c.b16 %v646, %v645
        %v650 = vpack.c.b16 %v648, %v647
        %vm653 = vcmask 261120
        %v655 = vsel %vm653, %v629, 0
        %657 = vmatprep.subr.bf16.mxu0 0
        %658 = vmatpush1.bf16.msra.mxu0 %v649
        %659 = vmatprep.subr.bf16.mxu0 0
        %660 = vmatpush1.bf16.msra.mxu0 %v650
        %661 = vmatprep.subr.bf16.mxu0 0
        %662 = vmatpush1.bf16.msra.mxu0 0
        %663 = vmatprep.subr.bf16.mxu0 0
        %664 = vmatpush1.bf16.msra.mxu0 0
        %665 = vmatprep.subr.bf16.mxu0 0
        %666 = vmatpush1.bf16.msra.mxu0 0
        %667 = vmatprep.subr.bf16.mxu0 0
        %668 = vmatpush1.bf16.msra.mxu0 0
        %669 = vmatprep.subr.bf16.mxu0 0
        %670 = vmatpush1.bf16.msra.mxu0 0
        %671 = vmatprep.subr.bf16.mxu0 0
        %672 = vmatpush1.bf16.msra.mxu0 0
        %673 = vmatprep.subr.bf16.mxu0 0
        %674 = vmatpush1.bf16.msra.mxu0 0
        %675 = vmatprep.subr.bf16.mxu0 0
        %676 = vmatpush1.bf16.msra.mxu0 0
        %677 = vmatprep.subr.bf16.mxu0 0
        %678 = vmatpush1.bf16.msra.mxu0 0
        %679 = vmatprep.subr.bf16.mxu0 0
        %680 = vmatpush1.bf16.msra.mxu0 0
        %681 = vmatprep.subr.bf16.mxu0 0
        %682 = vmatpush1.bf16.msra.mxu0 0
        %683 = vmatprep.subr.bf16.mxu0 0
        %684 = vmatpush1.bf16.msra.mxu0 0
        %685 = vmatprep.subr.bf16.mxu0 0
        %686 = vmatpush1.bf16.msra.mxu0 0
        %687 = vmatprep.subr.bf16.mxu0 0
        %688 = vmatpush1.bf16.msra.mxu0 0
        %689 = vmatprep.mubr.bf16.mxu0 0
        %690 = vmatmul.mubr.bf16.gmra.mrb[0].mxu0 %v655
        %v691 = vpop.f32.mrb[0].mxu0
        %v692 = vadd.f32 %v639, %v691
        %v693 = vpop.f32.mrb[0].mxu0
        %v694 = vpop.f32.mrb[0].mxu0
        %v695 = vpop.f32.mrb[0].mxu0
        %696 = vdwg.mxu0
        %v697 = vpack.c.bf16 %v628, %v628
        %v698 = vld [vmem:[#allocation6] sm:$0xf]
        %v699 = vld [vmem:[#allocation6 + $0x4] sm:$0xf]
        %v700 = vld [vmem:[#allocation6 + $0x8] sm:$0xf]
        %v701 = vld [vmem:[#allocation6 + $0xc] sm:$0xf]
        %v702 = vld [vmem:[#allocation8] sm:$0x1]
        %v704 = vlaneseq
        %v705 = vshrl.u32 %v704, 7
        %v706 = vsub.s32 0, %v705
        %v707 = vrot.slane %v702, %v706
        %v713 = vunpack.c.l.b16 %v698
        %v714 = vunpack.c.l.b16 %v699
        %v715 = vunpack.c.l.b16 %v700
        %v716 = vunpack.c.l.b16 %v701
        %v717 = vpack.c.b16 %v714, %v713
        %v718 = vpack.c.b16 %v716, %v715
        %v722 = vsel %vm653, %v697, 0
        %724 = vmatprep.subr.bf16.mxu0 0
        %725 = vmatpush1.bf16.msra.mxu0 %v717
        %726 = vmatprep.subr.bf16.mxu0 0
        %727 = vmatpush1.bf16.msra.mxu0 %v718
        %728 = vmatprep.subr.bf16.mxu0 0
        %729 = vmatpush1.bf16.msra.mxu0 0
        %730 = vmatprep.subr.bf16.mxu0 0
        %731 = vmatpush1.bf16.msra.mxu0 0
        %732 = vmatprep.subr.bf16.mxu0 0
        %733 = vmatpush1.bf16.msra.mxu0 0
        %734 = vmatprep.subr.bf16.mxu0 0
        %735 = vmatpush1.bf16.msra.mxu0 0
        %736 = vmatprep.subr.bf16.mxu0 0
        %737 = vmatpush1.bf16.msra.mxu0 0
        %738 = vmatprep.subr.bf16.mxu0 0
        %739 = vmatpush1.bf16.msra.mxu0 0
        %740 = vmatprep.subr.bf16.mxu0 0
        %741 = vmatpush1.bf16.msra.mxu0 0
        %742 = vmatprep.subr.bf16.mxu0 0
        %743 = vmatpush1.bf16.msra.mxu0 0
        %744 = vmatprep.subr.bf16.mxu0 0
        %745 = vmatpush1.bf16.msra.mxu0 0
        %746 = vmatprep.subr.bf16.mxu0 0
        %747 = vmatpush1.bf16.msra.mxu0 0
        %748 = vmatprep.subr.bf16.mxu0 0
        %749 = vmatpush1.bf16.msra.mxu0 0
        %750 = vmatprep.subr.bf16.mxu0 0
        %751 = vmatpush1.bf16.msra.mxu0 0
        %752 = vmatprep.subr.bf16.mxu0 0
        %753 = vmatpush1.bf16.msra.mxu0 0
        %754 = vmatprep.subr.bf16.mxu0 0
        %755 = vmatpush1.bf16.msra.mxu0 0
        %756 = vmatprep.mubr.bf16.mxu0 0
        %757 = vmatmul.mubr.bf16.gmra.mrb[0].mxu0 %v722
        %v758 = vpop.f32.mrb[0].mxu0
        %v759 = vadd.f32 %v707, %v758
        %v760 = vpop.f32.mrb[0].mxu0
        %v761 = vpop.f32.mrb[0].mxu0
        %v762 = vpop.f32.mrb[0].mxu0
        %763 = vdwg.mxu0
        %v764 = vmul.f32 %v692, 0.35355338
        %v765 = vld [vmem:[%s625] sm:$0x1]
        %v767 = vlaneseq
        %v768 = vshrl.u32 %v767, 7
        %v769 = vsub.s32 0, %v768
        %v770 = vrot.slane %v765, %v769
        %v772 = vpack.c.bf16 %v764, %v764
        %v773 = vpack.c.bf16 %v759, %v759
        %vm774 = vcmask 64512
        %v776 = vsel %vm774, %v772, 0
        %v779 = vsel %vm774, %v773, 0
        %781 = vmatprep.subr.bf16.mxu0 0
        %782 = vmatpush1.bf16.xpose.msra.mxu0 %v779
        %783 = vmatprep.subr.bf16.mxu0 0
        %784 = vmatpush1.bf16.xpose.msra.mxu0 0
        %785 = vmatprep.subr.bf16.mxu0 0
        %786 = vmatpush1.bf16.xpose.msra.mxu0 0
        %787 = vmatprep.subr.bf16.mxu0 0
        %788 = vmatpush1.bf16.xpose.msra.mxu0 0
        %789 = vmatprep.subr.bf16.mxu0 0
        %790 = vmatpush1.bf16.xpose.msra.mxu0 0
        %791 = vmatprep.subr.bf16.mxu0 0
        %792 = vmatpush1.bf16.xpose.msra.mxu0 0
        %793 = vmatprep.subr.bf16.mxu0 0
        %794 = vmatpush1.bf16.xpose.msra.mxu0 0
        %795 = vmatprep.subr.bf16.mxu0 0
        %796 = vmatpush1.bf16.xpose.msra.mxu0 0
        %797 = vmatprep.subr.bf16.mxu0 0
        %798 = vmatpush1.bf16.xpose.msra.mxu0 0
        %799 = vmatprep.subr.bf16.mxu0 0
        %800 = vmatpush1.bf16.xpose.msra.mxu0 0
        %801 = vmatprep.subr.bf16.mxu0 0
        %802 = vmatpush1.bf16.xpose.msra.mxu0 0
        %803 = vmatprep.subr.bf16.mxu0 0
        %804 = vmatpush1.bf16.xpose.msra.mxu0 0
        %805 = vmatprep.subr.bf16.mxu0 0
        %806 = vmatpush1.bf16.xpose.msra.mxu0 0
        %807 = vmatprep.subr.bf16.mxu0 0
        %808 = vmatpush1.bf16.xpose.msra.mxu0 0
        %809 = vmatprep.subr.bf16.mxu0 0
        %810 = vmatpush1.bf16.xpose.msra.mxu0 0
        %811 = vmatprep.subr.bf16.mxu0 0
        %812 = vmatpush1.bf16.xpose.msra.mxu0 0
        %813 = vmatprep.mubr.bf16.mxu0 0
        %814 = vmatmul.mubr.bf16.gmra.mrb[0].mxu0 %v776
        %v815 = vpop.f32.mrb[0].mxu0
        %v816 = vadd.f32 %v770, %v815
        %v817 = vpop.f32.mrb[0].mxu0
        %v818 = vpop.f32.mrb[0].mxu0
        %v819 = vpop.f32.mrb[0].mxu0
        %820 = vdwg.mxu0
        %v821 = vsel %vm774, %v816, -inf
        %822 = vmax.xlane.f32.xlu0 %v821
        %v823 = vpop.xlane.xlu0 %822
        %v824 = vsub.f32 %v816, %v823
        %v825 = vmul.f32 %v824, 1.442695
        %v826 = vpow.pop %v825
        %v827 = vsel %vm774, %v826, 0.0
        %828 = vadd.xlane.f32.xlu0 %v827
        %v829 = vpop.xlane.xlu0 %828
        %v830 = vrcp.pop %v829
        %v831 = vmul.f32 %v826, %v830
        %v832 = vpack.c.bf16 %v831, %v831
        %834 = vrot.lane.b32.xlu0 %v773, 96
        %v835 = vpop.permute.xlu0 %834
        %v837 = vsel %vm774, %v832, 0
        %vm839 = vcmask 1043456
        %v841 = vsel %vm839, %v835, 0
        %843 = vmatprep.subr.bf16.mxu0 0
        %844 = vmatpush1.bf16.msra.mxu0 %v841
        %845 = vmatprep.subr.bf16.mxu0 0
        %846 = vmatpush1.bf16.msra.mxu0 0
        %847 = vmatprep.subr.bf16.mxu0 0
        %848 = vmatpush1.bf16.msra.mxu0 0
        %849 = vmatprep.subr.bf16.mxu0 0
        %850 = vmatpush1.bf16.msra.mxu0 0
        %851 = vmatprep.subr.bf16.mxu0 0
        %852 = vmatpush1.bf16.msra.mxu0 0
        %853 = vmatprep.subr.bf16.mxu0 0
        %854 = vmatpush1.bf16.msra.mxu0 0
        %855 = vmatprep.subr.bf16.mxu0 0
        %856 = vmatpush1.bf16.msra.mxu0 0
        %857 = vmatprep.subr.bf16.mxu0 0
        %858 = vmatpush1.bf16.msra.mxu0 0
        %859 = vmatprep.subr.bf16.mxu0 0
        %860 = vmatpush1.bf16.msra.mxu0 0
        %861 = vmatprep.subr.bf16.mxu0 0
        %862 = vmatpush1.bf16.msra.mxu0 0
        %863 = vmatprep.subr.bf16.mxu0 0
        %864 = vmatpush1.bf16.msra.mxu0 0
        %865 = vmatprep.subr.bf16.mxu0 0
        %866 = vmatpush1.bf16.msra.mxu0 0
        %867 = vmatprep.subr.bf16.mxu0 0
        %868 = vmatpush1.bf16.msra.mxu0 0
        %869 = vmatprep.subr.bf16.mxu0 0
        %870 = vmatpush1.bf16.msra.mxu0 0
        %871 = vmatprep.subr.bf16.mxu0 0
        %872 = vmatpush1.bf16.msra.mxu0 0
        %873 = vmatprep.subr.bf16.mxu0 0
        %874 = vmatpush1.bf16.msra.mxu0 0
        %875 = vmatprep.mubr.bf16.mxu0 0
        %876 = vmatmul.mubr.bf16.gmra.mrb[0].mxu0 %v837
        %v877 = vpop.f32.mrb[0].mxu0
        %v878 = vadd.f32 0.0, %v877
        %v879 = vpop.f32.mrb[0].mxu0
        %v880 = vpop.f32.mrb[0].mxu0
        %v881 = vpop.f32.mrb[0].mxu0
        %882 = vdwg.mxu0
        %883 = vst.msk [vmem:[#allocation2] sm:$0xff] %vm774, %v878
        %885 = vrot.lane.b32.xlu0 %v772, 120
        %v886 = vpop.permute.xlu0 %885
        %887 = vrot.lane.b32.xlu0 %v773, 120
        %v888 = vpop.permute.xlu0 %887
        %v890 = vsel %vm774, %v886, 0
        %v893 = vsel %vm774, %v888, 0
        %895 = vmatprep.subr.bf16.mxu0 0
        %896 = vmatpush1.bf16.xpose.msra.mxu0 %v893
        %897 = vmatprep.subr.bf16.mxu0 0
        %898 = vmatpush1.bf16.xpose.msra.mxu0 0
        %899 = vmatprep.subr.bf16.mxu0 0
        %900 = vmatpush1.bf16.xpose.msra.mxu0 0
        %901 = vmatprep.subr.bf16.mxu0 0
        %902 = vmatpush1.bf16.xpose.msra.mxu0 0
        %903 = vmatprep.subr.bf16.mxu0 0
        %904 = vmatpush1.bf16.xpose.msra.mxu0 0
        %905 = vmatprep.subr.bf16.mxu0 0
        %906 = vmatpush1.bf16.xpose.msra.mxu0 0
        %907 = vmatprep.subr.bf16.mxu0 0
        %908 = vmatpush1.bf16.xpose.msra.mxu0 0
        %909 = vmatprep.subr.bf16.mxu0 0
        %910 = vmatpush1.bf16.xpose.msra.mxu0 0
        %911 = vmatprep.subr.bf16.mxu0 0
        %912 = vmatpush1.bf16.xpose.msra.mxu0 0
        %913 = vmatprep.subr.bf16.mxu0 0
        %914 = vmatpush1.bf16.xpose.msra.mxu0 0
        %915 = vmatprep.subr.bf16.mxu0 0
        %916 = vmatpush1.bf16.xpose.msra.mxu0 0
        %917 = vmatprep.subr.bf16.mxu0 0
        %918 = vmatpush1.bf16.xpose.msra.mxu0 0
        %919 = vmatprep.subr.bf16.mxu0 0
        %920 = vmatpush1.bf16.xpose.msra.mxu0 0
        %921 = vmatprep.subr.bf16.mxu0 0
        %922 = vmatpush1.bf16.xpose.msra.mxu0 0
        %923 = vmatprep.subr.bf16.mxu0 0
        %924 = vmatpush1.bf16.xpose.msra.mxu0 0
        %925 = vmatprep.subr.bf16.mxu0 0
        %926 = vmatpush1.bf16.xpose.msra.mxu0 0
        %927 = vmatprep.mubr.bf16.mxu0 0
        %928 = vmatmul.mubr.bf16.gmra.mrb[0].mxu0 %v890
        %v929 = vpop.f32.mrb[0].mxu0
        %v930 = vadd.f32 %v770, %v929
        %v931 = vpop.f32.mrb[0].mxu0
        %v932 = vpop.f32.mrb[0].mxu0
        %v933 = vpop.f32.mrb[0].mxu0
        %934 = vdwg.mxu0
        %v935 = vsel %vm774, %v930, -inf
        %936 = vmax.xlane.f32.xlu0 %v935
        %v937 = vpop.xlane.xlu0 %936
        %v938 = vsub.f32 %v930, %v937
        %v939 = vmul.f32 %v938, 1.442695
        %v940 = vpow.pop %v939
        %v941 = vsel %vm774, %v940, 0.0
        %942 = vadd.xlane.f32.xlu0 %v941
        %v943 = vpop.xlane.xlu0 %942
        %v944 = vrcp.pop %v943
        %v945 = vmul.f32 %v940, %v944
        %v946 = vpack.c.bf16 %v945, %v945
        %947 = vrot.lane.b32.xlu0 %v773, 88
        %v948 = vpop.permute.xlu0 %947
        %v950 = vsel %vm774, %v946, 0
        %v953 = vsel %vm839, %v948, 0
        %955 = vmatprep.subr.bf16.mxu0 0
        %956 = vmatpush1.bf16.msra.mxu0 %v953
        %957 = vmatprep.subr.bf16.mxu0 0
        %958 = vmatpush1.bf16.msra.mxu0 0
        %959 = vmatprep.subr.bf16.mxu0 0
        %960 = vmatpush1.bf16.msra.mxu0 0
        %961 = vmatprep.subr.bf16.mxu0 0
        %962 = vmatpush1.bf16.msra.mxu0 0
        %963 = vmatprep.subr.bf16.mxu0 0
        %964 = vmatpush1.bf16.msra.mxu0 0
        %965 = vmatprep.subr.bf16.mxu0 0
        %966 = vmatpush1.bf16.msra.mxu0 0
        %967 = vmatprep.subr.bf16.mxu0 0
        %968 = vmatpush1.bf16.msra.mxu0 0
        %969 = vmatprep.subr.bf16.mxu0 0
        %970 = vmatpush1.bf16.msra.mxu0 0
        %971 = vmatprep.subr.bf16.mxu0 0
        %972 = vmatpush1.bf16.msra.mxu0 0
        %973 = vmatprep.subr.bf16.mxu0 0
        %974 = vmatpush1.bf16.msra.mxu0 0
        %975 = vmatprep.subr.bf16.mxu0 0
        %976 = vmatpush1.bf16.msra.mxu0 0
        %977 = vmatprep.subr.bf16.mxu0 0
        %978 = vmatpush1.bf16.msra.mxu0 0
        %979 = vmatprep.subr.bf16.mxu0 0
        %980 = vmatpush1.bf16.msra.mxu0 0
        %981 = vmatprep.subr.bf16.mxu0 0
        %982 = vmatpush1.bf16.msra.mxu0 0
        %983 = vmatprep.subr.bf16.mxu0 0
        %984 = vmatpush1.bf16.msra.mxu0 0
        %985 = vmatprep.subr.bf16.mxu0 0
        %986 = vmatpush1.bf16.msra.mxu0 0
        %987 = vmatprep.mubr.bf16.mxu0 0
        %988 = vmatmul.mubr.bf16.gmra.mrb[0].mxu0 %v950
        %v989 = vpop.f32.mrb[0].mxu0
        %v990 = vadd.f32 0.0, %v989
        %v991 = vpop.f32.mrb[0].mxu0
        %v992 = vpop.f32.mrb[0].mxu0
        %v993 = vpop.f32.mrb[0].mxu0
        %994 = vdwg.mxu0
        %996 = vrot.lane.b32.xlu0 %v990, 8
        %v997 = vpop.permute.xlu0 %996
        %vm999 = vcmask 130112
        %1000 = vst.msk [vmem:[#allocation2] sm:$0xff] %vm999, %v997
        %1001 = vrot.lane.b32.xlu0 %v772, 112
        %v1002 = vpop.permute.xlu0 %1001
        %1003 = vrot.lane.b32.xlu0 %v773, 112
        %v1004 = vpop.permute.xlu0 %1003
        %v1006 = vsel %vm774, %v1002, 0
        %v1009 = vsel %vm774, %v1004, 0
        %1011 = vmatprep.subr.bf16.mxu0 0
        %1012 = vmatpush1.bf16.xpose.msra.mxu0 %v1009
        %1013 = vmatprep.subr.bf16.mxu0 0
        %1014 = vmatpush1.bf16.xpose.msra.mxu0 0
        %1015 = vmatprep.subr.bf16.mxu0 0
        %1016 = vmatpush1.bf16.xpose.msra.mxu0 0
        %1017 = vmatprep.subr.bf16.mxu0 0
        %1018 = vmatpush1.bf16.xpose.msra.mxu0 0
        %1019 = vmatprep.subr.bf16.mxu0 0
        %1020 = vmatpush1.bf16.xpose.msra.mxu0 0
        %1021 = vmatprep.subr.bf16.mxu0 0
        %1022 = vmatpush1.bf16.xpose.msra.mxu0 0
        %1023 = vmatprep.subr.bf16.mxu0 0
        %1024 = vmatpush1.bf16.xpose.msra.mxu0 0
        %1025 = vmatprep.subr.bf16.mxu0 0
        %1026 = vmatpush1.bf16.xpose.msra.mxu0 0
        %1027 = vmatprep.subr.bf16.mxu0 0
        %1028 = vmatpush1.bf16.xpose.msra.mxu0 0
        %1029 = vmatprep.subr.bf16.mxu0 0
        %1030 = vmatpush1.bf16.xpose.msra.mxu0 0
        %1031 = vmatprep.subr.bf16.mxu0 0
        %1032 = vmatpush1.bf16.xpose.msra.mxu0 0
        %1033 = vmatprep.subr.bf16.mxu0 0
        %1034 = vmatpush1.bf16.xpose.msra.mxu0 0
        %1035 = vmatprep.subr.bf16.mxu0 0
        %1036 = vmatpush1.bf16.xpose.msra.mxu0 0
        %1037 = vmatprep.subr.bf16.mxu0 0
        %1038 = vmatpush1.bf16.xpose.msra.mxu0 0
        %1039 = vmatprep.subr.bf16.mxu0 0
        %1040 = vmatpush1.bf16.xpose.msra.mxu0 0
        %1041 = vmatprep.subr.bf16.mxu0 0
        %1042 = vmatpush1.bf16.xpose.msra.mxu0 0
        %1043 = vmatprep.mubr.bf16.mxu0 0
        %1044 = vmatmul.mubr.bf16.gmra.mrb[0].mxu0 %v1006
        %v1045 = vpop.f32.mrb[0].mxu0
        %v1046 = vadd.f32 %v770, %v1045
        %v1047 = vpop.f32.mrb[0].mxu0
        %v1048 = vpop.f32.mrb[0].mxu0
        %v1049 = vpop.f32.mrb[0].mxu0
        %1050 = vdwg.mxu0
        %v1051 = vsel %vm774, %v1046, -inf
        %1052 = vmax.xlane.f32.xlu0 %v1051
        %v1053 = vpop.xlane.xlu0 %1052
        %v1054 = vsub.f32 %v1046, %v1053
        %v1055 = vmul.f32 %v1054, 1.442695
        %v1056 = vpow.pop %v1055
        %v1057 = vsel %vm774, %v1056, 0.0
        %1058 = vadd.xlane.f32.xlu0 %v1057
        %v1059 = vpop.xlane.xlu0 %1058
        %v1060 = vrcp.pop %v1059
        %v1061 = vmul.f32 %v1056, %v1060
        %v1062 = vpack.c.bf16 %v1061, %v1061
        %1063 = vrot.lane.b32.xlu0 %v773, 80
        %v1064 = vpop.permute.xlu0 %1063
        %v1066 = vsel %vm774, %v1062, 0
        %v1069 = vsel %vm839, %v1064, 0
        %1071 = vmatprep.subr.bf16.mxu0 0
        %1072 = vmatpush1.bf16.msra.mxu0 %v1069
        %1073 = vmatprep.subr.bf16.mxu0 0
        %1074 = vmatpush1.bf16.msra.mxu0 0
        %1075 = vmatprep.subr.bf16.mxu0 0
        %1076 = vmatpush1.bf16.msra.mxu0 0
        %1077 = vmatprep.subr.bf16.mxu0 0
        %1078 = vmatpush1.bf16.msra.mxu0 0
        %1079 = vmatprep.subr.bf16.mxu0 0
        %1080 = vmatpush1.bf16.msra.mxu0 0
        %1081 = vmatprep.subr.bf16.mxu0 0
        %1082 = vmatpush1.bf16.msra.mxu0 0
        %1083 = vmatprep.subr.bf16.mxu0 0
        %1084 = vmatpush1.bf16.msra.mxu0 0
        %1085 = vmatprep.subr.bf16.mxu0 0
        %1086 = vmatpush1.bf16.msra.mxu0 0
        %1087 = vmatprep.subr.bf16.mxu0 0
        %1088 = vmatpush1.bf16.msra.mxu0 0
        %1089 = vmatprep.subr.bf16.mxu0 0
        %1090 = vmatpush1.bf16.msra.mxu0 0
        %1091 = vmatprep.subr.bf16.mxu0 0
        %1092 = vmatpush1.bf16.msra.mxu0 0
        %1093 = vmatprep.subr.bf16.mxu0 0
        %1094 = vmatpush1.bf16.msra.mxu0 0
        %1095 = vmatprep.subr.bf16.mxu0 0
        %1096 = vmatpush1.bf16.msra.mxu0 0
        %1097 = vmatprep.subr.bf16.mxu0 0
        %1098 = vmatpush1.bf16.msra.mxu0 0
        %1099 = vmatprep.subr.bf16.mxu0 0
        %1100 = vmatpush1.bf16.msra.mxu0 0
        %1101 = vmatprep.subr.bf16.mxu0 0
        %1102 = vmatpush1.bf16.msra.mxu0 0
        %1103 = vmatprep.mubr.bf16.mxu0 0
        %1104 = vmatmul.mubr.bf16.gmra.mrb[0].mxu0 %v1066
        %v1105 = vpop.f32.mrb[0].mxu0
        %v1106 = vadd.f32 0.0, %v1105
        %v1107 = vpop.f32.mrb[0].mxu0
        %v1108 = vpop.f32.mrb[0].mxu0
        %v1109 = vpop.f32.mrb[0].mxu0
        %1110 = vdwg.mxu0
        %1112 = vrot.lane.b32.xlu0 %v1106, 16
        %v1113 = vpop.permute.xlu0 %1112
        %vm1115 = vcmask 195712
        %1116 = vst.msk [vmem:[#allocation2] sm:$0xff] %vm1115, %v1113
        %1117 = vrot.lane.b32.xlu0 %v772, 104
        %v1118 = vpop.permute.xlu0 %1117
        %1119 = vrot.lane.b32.xlu0 %v773, 104
        %v1120 = vpop.permute.xlu0 %1119
        %v1122 = vsel %vm774, %v1118, 0
        %v1125 = vsel %vm774, %v1120, 0
        %1127 = vmatprep.subr.bf16.mxu0 0
        %1128 = vmatpush1.bf16.xpose.msra.mxu0 %v1125
        %1129 = vmatprep.subr.bf16.mxu0 0
        %1130 = vmatpush1.bf16.xpose.msra.mxu0 0
        %1131 = vmatprep.subr.bf16.mxu0 0
        %1132 = vmatpush1.bf16.xpose.msra.mxu0 0
        %1133 = vmatprep.subr.bf16.mxu0 0
        %1134 = vmatpush1.bf16.xpose.msra.mxu0 0
        %1135 = vmatprep.subr.bf16.mxu0 0
        %1136 = vmatpush1.bf16.xpose.msra.mxu0 0
        %1137 = vmatprep.subr.bf16.mxu0 0
        %1138 = vmatpush1.bf16.xpose.msra.mxu0 0
        %1139 = vmatprep.subr.bf16.mxu0 0
        %1140 = vmatpush1.bf16.xpose.msra.mxu0 0
        %1141 = vmatprep.subr.bf16.mxu0 0
        %1142 = vmatpush1.bf16.xpose.msra.mxu0 0
        %1143 = vmatprep.subr.bf16.mxu0 0
        %1144 = vmatpush1.bf16.xpose.msra.mxu0 0
        %1145 = vmatprep.subr.bf16.mxu0 0
        %1146 = vmatpush1.bf16.xpose.msra.mxu0 0
        %1147 = vmatprep.subr.bf16.mxu0 0
        %1148 = vmatpush1.bf16.xpose.msra.mxu0 0
        %1149 = vmatprep.subr.bf16.mxu0 0
        %1150 = vmatpush1.bf16.xpose.msra.mxu0 0
        %1151 = vmatprep.subr.bf16.mxu0 0
        %1152 = vmatpush1.bf16.xpose.msra.mxu0 0
        %1153 = vmatprep.subr.bf16.mxu0 0
        %1154 = vmatpush1.bf16.xpose.msra.mxu0 0
        %1155 = vmatprep.subr.bf16.mxu0 0
        %1156 = vmatpush1.bf16.xpose.msra.mxu0 0
        %1157 = vmatprep.subr.bf16.mxu0 0
        %1158 = vmatpush1.bf16.xpose.msra.mxu0 0
        %1159 = vmatprep.mubr.bf16.mxu0 0
        %1160 = vmatmul.mubr.bf16.gmra.mrb[0].mxu0 %v1122
        %v1161 = vpop.f32.mrb[0].mxu0
        %v1162 = vadd.f32 %v770, %v1161
        %v1163 = vpop.f32.mrb[0].mxu0
        %v1164 = vpop.f32.mrb[0].mxu0
        %v1165 = vpop.f32.mrb[0].mxu0
        %1166 = vdwg.mxu0
        %v1167 = vsel %vm774, %v1162, -inf
        %1168 = vmax.xlane.f32.xlu0 %v1167
        %v1169 = vpop.xlane.xlu0 %1168
        %v1170 = vsub.f32 %v1162, %v1169
        %v1171 = vmul.f32 %v1170, 1.442695
        %v1172 = vpow.pop %v1171
        %v1173 = vsel %vm774, %v1172, 0.0
        %1174 = vadd.xlane.f32.xlu0 %v1173
        %v1175 = vpop.xlane.xlu0 %1174
        %v1176 = vrcp.pop %v1175
        %v1177 = vmul.f32 %v1172, %v1176
        %v1178 = vpack.c.bf16 %v1177, %v1177
        %1179 = vrot.lane.b32.xlu0 %v773, 72
        %v1180 = vpop.permute.xlu0 %1179
        %v1182 = vsel %vm774, %v1178, 0
        %v1185 = vsel %vm839, %v1180, 0
        %1187 = vmatprep.subr.bf16.mxu0 0
        %1188 = vmatpush1.bf16.msra.mxu0 %v1185
        %1189 = vmatprep.subr.bf16.mxu0 0
        %1190 = vmatpush1.bf16.msra.mxu0 0
        %1191 = vmatprep.subr.bf16.mxu0 0
        %1192 = vmatpush1.bf16.msra.mxu0 0
        %1193 = vmatprep.subr.bf16.mxu0 0
        %1194 = vmatpush1.bf16.msra.mxu0 0
        %1195 = vmatprep.subr.bf16.mxu0 0
        %1196 = vmatpush1.bf16.msra.mxu0 0
        %1197 = vmatprep.subr.bf16.mxu0 0
        %1198 = vmatpush1.bf16.msra.mxu0 0
        %1199 = vmatprep.subr.bf16.mxu0 0
        %1200 = vmatpush1.bf16.msra.mxu0 0
        %1201 = vmatprep.subr.bf16.mxu0 0
        %1202 = vmatpush1.bf16.msra.mxu0 0
        %1203 = vmatprep.subr.bf16.mxu0 0
        %1204 = vmatpush1.bf16.msra.mxu0 0
        %1205 = vmatprep.subr.bf16.mxu0 0
        %1206 = vmatpush1.bf16.msra.mxu0 0
        %1207 = vmatprep.subr.bf16.mxu0 0
        %1208 = vmatpush1.bf16.msra.mxu0 0
        %1209 = vmatprep.subr.bf16.mxu0 0
        %1210 = vmatpush1.bf16.msra.mxu0 0
        %1211 = vmatprep.subr.bf16.mxu0 0
        %1212 = vmatpush1.bf16.msra.mxu0 0
        %1213 = vmatprep.subr.bf16.mxu0 0
        %1214 = vmatpush1.bf16.msra.mxu0 0
        %1215 = vmatprep.subr.bf16.mxu0 0
        %1216 = vmatpush1.bf16.msra.mxu0 0
        %1217 = vmatprep.subr.bf16.mxu0 0
        %1218 = vmatpush1.bf16.msra.mxu0 0
        %1219 = vmatprep.mubr.bf16.mxu0 0
        %1220 = vmatmul.mubr.bf16.gmra.mrb[0].mxu0 %v1182
        %v1221 = vpop.f32.mrb[0].mxu0
        %v1222 = vadd.f32 0.0, %v1221
        %v1223 = vpop.f32.mrb[0].mxu0
        %v1224 = vpop.f32.mrb[0].mxu0
        %v1225 = vpop.f32.mrb[0].mxu0
        %1226 = vdwg.mxu0
        %1228 = vrot.lane.b32.xlu0 %v1222, 24
        %v1229 = vpop.permute.xlu0 %1228
        %vm1231 = vcmask 261312
        %1232 = vst.msk [vmem:[#allocation2] sm:$0xff] %vm1231, %v1229
        %v1233 = vld [vmem:[#allocation2] sm:$0xff]
        %v1234 = vpack.c.bf16 %v1233, %v1233
        %v1235 = vld [vmem:[#allocation9] sm:$0xf]
        %v1236 = vld [vmem:[#allocation9 + $0x4] sm:$0xf]
        %v1237 = vld [vmem:[#allocation9 + $0x8] sm:$0xf]
        %v1238 = vld [vmem:[#allocation9 + $0xc] sm:$0xf]
        %v1239 = vld [vmem:[#allocation11] sm:$0x1]
        %v1241 = vlaneseq
        %v1242 = vshrl.u32 %v1241, 7
        %v1243 = vsub.s32 0, %v1242
        %v1244 = vrot.slane %v1239, %v1243
        %v1250 = vunpack.c.l.b16 %v1235
        %v1251 = vunpack.c.l.b16 %v1236
        %v1252 = vunpack.c.l.b16 %v1237
        %v1253 = vunpack.c.l.b16 %v1238
        %v1254 = vpack.c.b16 %v1251, %v1250
        %v1255 = vpack.c.b16 %v1253, %v1252
        %v1259 = vsel %vm653, %v1234, 0
        %1261 = vmatprep.subr.bf16.mxu0 0
        %1262 = vmatpush1.bf16.msra.mxu0 %v1254
        %1263 = vmatprep.subr.bf16.mxu0 0
        %1264 = vmatpush1.bf16.msra.mxu0 %v1255
        %1265 = vmatprep.subr.bf16.mxu0 0
        %1266 = vmatpush1.bf16.msra.mxu0 0
        %1267 = vmatprep.subr.bf16.mxu0 0
        %1268 = vmatpush1.bf16.msra.mxu0 0
        %1269 = vmatprep.subr.bf16.mxu0 0
        %1270 = vmatpush1.bf16.msra.mxu0 0
        %1271 = vmatprep.subr.bf16.mxu0 0
        %1272 = vmatpush1.bf16.msra.mxu0 0
        %1273 = vmatprep.subr.bf16.mxu0 0
        %1274 = vmatpush1.bf16.msra.mxu0 0
        %1275 = vmatprep.subr.bf16.mxu0 0
        %1276 = vmatpush1.bf16.msra.mxu0 0
        %1277 = vmatprep.subr.bf16.mxu0 0
        %1278 = vmatpush1.bf16.msra.mxu0 0
        %1279 = vmatprep.subr.bf16.mxu0 0
        %1280 = vmatpush1.bf16.msra.mxu0 0
        %1281 = vmatprep.subr.bf16.mxu0 0
        %1282 = vmatpush1.bf16.msra.mxu0 0
        %1283 = vmatprep.subr.bf16.mxu0 0
        %1284 = vmatpush1.bf16.msra.mxu0 0
        %1285 = vmatprep.subr.bf16.mxu0 0
        %1286 = vmatpush1.bf16.msra.mxu0 0
        %1287 = vmatprep.subr.bf16.mxu0 0
        %1288 = vmatpush1.bf16.msra.mxu0 0
        %1289 = vmatprep.subr.bf16.mxu0 0
        %1290 = vmatpush1.bf16.msra.mxu0 0
        %1291 = vmatprep.subr.bf16.mxu0 0
        %1292 = vmatpush1.bf16.msra.mxu0 0
        %1293 = vmatprep.mubr.bf16.mxu0 0
        %1294 = vmatmul.mubr.bf16.gmra.mrb[0].mxu0 %v1259
        %v1295 = vpop.f32.mrb[0].mxu0
        %v1296 = vadd.f32 %v1244, %v1295
        %v1297 = vpop.f32.mrb[0].mxu0
        %v1298 = vpop.f32.mrb[0].mxu0
        %v1299 = vpop.f32.mrb[0].mxu0
        %1300 = vdwg.mxu0
        %v1301 = vadd.f32 %v1296, %v627
        %v1302 = vld [vmem:[#allocation12] sm:$0x1]
        %v1303 = vld [vmem:[%s10] sm:$0x1]
        %v1304 = vsel %vm653, %v1301, 0.0
        %1305 = vadd.xlane.f32.xlu0 %v1304
        %v1306 = vpop.xlane.xlu0 %1305
        %v1307 = vrcp.pop 32.0
        %v1308 = vmul.f32 %v1306, %v1307
        %v1309 = vsub.f32 %v1301, %v1308
        %v1310 = vmul.f32 %v1309, %v1309
        %v1311 = vsel %vm653, %v1310, 0.0
        %1312 = vadd.xlane.f32.xlu0 %v1311
        %v1313 = vpop.xlane.xlu0 %1312
        %v1314 = vmul.f32 %v1313, %v1307
        %v1315 = vadd.f32 %v1314, 1e-12
        %v1316 = vrsqrt.pop %v1315
        %v1317 = vmul.f32 %v1309, %v1316
        %v1319 = vlaneseq
        %v1320 = vshrl.u32 %v1319, 7
        %v1321 = vsub.s32 0, %v1320
        %v1322 = vrot.slane %v1302, %v1321
        %v1324 = vmul.f32 %v1317, %v1322
        %v1326 = vlaneseq
        %v1327 = vshrl.u32 %v1326, 7
        %v1328 = vsub.s32 0, %v1327
        %v1329 = vrot.slane %v1303, %v1328
        %v1331 = vadd.f32 %v1324, %v1329
        %v1332 = vld [vmem:[%s11] sm:$0x1]
        %v1333 = vld [vmem:[%s12] sm:$0x1]
        %v1334 = vsel %vm653, %v1331, 0.0
        %1335 = vadd.xlane.f32.xlu0 %v1334
        %v1336 = vpop.xlane.xlu0 %1335
        %v1337 = vmul.f32 %v1336, %v1307
        %v1338 = vsub.f32 %v1331, %v1337
        %v1339 = vmul.f32 %v1338, %v1338
        %v1340 = vsel %vm653, %v1339, 0.0
        %1341 = vadd.xlane.f32.xlu0 %v1340
        %v1342 = vpop.xlane.xlu0 %1341
        %v1343 = vmul.f32 %v1342, %v1307
        %v1344 = vadd.f32 %v1343, 1e-12
        %v1345 = vrsqrt.pop %v1344
        %v1346 = vmul.f32 %v1338, %v1345
        %v1348 = vlaneseq
        %v1349 = vshrl.u32 %v1348, 7
        %v1350 = vsub.s32 0, %v1349
        %v1351 = vrot.slane %v1332, %v1350
        %v1353 = vmul.f32 %v1346, %v1351
        %v1355 = vlaneseq
        %v1356 = vshrl.u32 %v1355, 7
        %v1357 = vsub.s32 0, %v1356
        %v1358 = vrot.slane %v1333, %v1357
        %v1360 = vadd.f32 %v1353, %v1358
        %v1361 = vpack.c.bf16 %v1360, %v1360
        %v1362 = vld [vmem:[%s13] sm:$0xf]
        %v1363 = vld [vmem:[%s13 + $0x4] sm:$0xf]
        %v1364 = vld [vmem:[%s13 + $0x8] sm:$0xf]
        %v1365 = vld [vmem:[%s13 + $0xc] sm:$0xf]
        %v1370 = vunpack.c.l.b16 %v1362
        %v1371 = vunpack.c.l.b16 %v1363
        %v1372 = vunpack.c.l.b16 %v1364
        %v1373 = vunpack.c.l.b16 %v1365
        %v1374 = vpack.c.b16 %v1371, %v1370
        %v1375 = vpack.c.b16 %v1373, %v1372
        %v1379 = vsel %vm653, %v1361, 0
        %1381 = vmatprep.subr.bf16.mxu0 0
        %1382 = vmatpush1.bf16.msra.mxu0 %v1374
        %1383 = vmatprep.subr.bf16.mxu0 0
        %1384 = vmatpush1.bf16.msra.mxu0 %v1375
        %1385 = vmatprep.subr.bf16.mxu0 0
        %1386 = vmatpush1.bf16.msra.mxu0 0
        %1387 = vmatprep.subr.bf16.mxu0 0
        %1388 = vmatpush1.bf16.msra.mxu0 0
        %1389 = vmatprep.subr.bf16.mxu0 0
        %1390 = vmatpush1.bf16.msra.mxu0 0
        %1391 = vmatprep.subr.bf16.mxu0 0
        %1392 = vmatpush1.bf16.msra.mxu0 0
        %1393 = vmatprep.subr.bf16.mxu0 0
        %1394 = vmatpush1.bf16.msra.mxu0 0
        %1395 = vmatprep.subr.bf16.mxu0 0
        %1396 = vmatpush1.bf16.msra.mxu0 0
        %1397 = vmatprep.subr.bf16.mxu0 0
        %1398 = vmatpush1.bf16.msra.mxu0 0
        %1399 = vmatprep.subr.bf16.mxu0 0
        %1400 = vmatpush1.bf16.msra.mxu0 0
        %1401 = vmatprep.subr.bf16.mxu0 0
        %1402 = vmatpush1.bf16.msra.mxu0 0
        %1403 = vmatprep.subr.bf16.mxu0 0
        %1404 = vmatpush1.bf16.msra.mxu0 0
        %1405 = vmatprep.subr.bf16.mxu0 0
        %1406 = vmatpush1.bf16.msra.mxu0 0
        %1407 = vmatprep.subr.bf16.mxu0 0
        %1408 = vmatpush1.bf16.msra.mxu0 0
        %1409 = vmatprep.subr.bf16.mxu0 0
        %1410 = vmatpush1.bf16.msra.mxu0 0
        %1411 = vmatprep.subr.bf16.mxu0 0
        %1412 = vmatpush1.bf16.msra.mxu0 0
        %1413 = vmatprep.mubr.bf16.mxu0 0
        %1414 = vmatmul.mubr.bf16.gmra.mrb[0].mxu0 %v1379
        %v1415 = vpop.f32.mrb[0].mxu0
        %v1416 = vadd.f32 0.0, %v1415
        %v1417 = vpop.f32.mrb[0].mxu0
        %v1418 = vpop.f32.mrb[0].mxu0
        %v1419 = vpop.f32.mrb[0].mxu0
        %1420 = vdwg.mxu0
        %v1421 = vmul.f32 %v1416, %v1416
        %v1422 = vmul.f32 %v1416, %v1421
        %v1423 = vmul.f32 %v1422, 0.044715
        %v1424 = vadd.f32 %v1416, %v1423
        %v1425 = vmul.f32 %v1424, 0.7978846
        %v1426 = vtanh.pop %v1425
        %v1427 = vadd.f32 %v1426, 1.0
        %v1428 = vmul.f32 %v1427, 0.5
        %v1429 = vmul.f32 %v1416, %v1428
        %v1430 = vpack.c.bf16 %v1429, %v1429
        %v1431 = vld [vmem:[%s14] sm:$0xf]
        %v1432 = vld [vmem:[%s14 + $0x4] sm:$0xf]
        %v1433 = vld [vmem:[%s14 + $0x8] sm:$0xf]
        %v1434 = vld [vmem:[%s14 + $0xc] sm:$0xf]
        %v1435 = vld [vmem:[%s14 + $0x10] sm:$0xf]
        %v1436 = vld [vmem:[%s14 + $0x14] sm:$0xf]
        %v1437 = vld [vmem:[%s14 + $0x18] sm:$0xf]
        %v1438 = vld [vmem:[%s14 + $0x1c] sm:$0xf]
        %v1447 = vunpack.c.l.b16 %v1431
        %v1448 = vunpack.c.l.b16 %v1432
        %v1449 = vunpack.c.l.b16 %v1433
        %v1450 = vunpack.c.l.b16 %v1434
        %v1451 = vunpack.c.l.b16 %v1435
        %v1452 = vunpack.c.l.b16 %v1436
        %v1453 = vunpack.c.l.b16 %v1437
        %v1454 = vunpack.c.l.b16 %v1438
        %v1455 = vpack.c.b16 %v1448, %v1447
        %v1456 = vpack.c.b16 %v1450, %v1449
        %v1457 = vpack.c.b16 %v1452, %v1451
        %v1458 = vpack.c.b16 %v1454, %v1453
        %vm1463 = vcmask 523264
        %v1465 = vsel %vm1463, %v1430, 0
        %1467 = vmatprep.subr.bf16.mxu0 0
        %1468 = vmatpush1.bf16.msra.mxu0 %v1455
        %1469 = vmatprep.subr.bf16.mxu0 0
        %1470 = vmatpush1.bf16.msra.mxu0 %v1456
        %1471 = vmatprep.subr.bf16.mxu0 0
        %1472 = vmatpush1.bf16.msra.mxu0 %v1457
        %1473 = vmatprep.subr.bf16.mxu0 0
        %1474 = vmatpush1.bf16.msra.mxu0 %v1458
        %1475 = vmatprep.subr.bf16.mxu0 0
        %1476 = vmatpush1.bf16.msra.mxu0 0
        %1477 = vmatprep.subr.bf16.mxu0 0
        %1478 = vmatpush1.bf16.msra.mxu0 0
        %1479 = vmatprep.subr.bf16.mxu0 0
        %1480 = vmatpush1.bf16.msra.mxu0 0
        %1481 = vmatprep.subr.bf16.mxu0 0
        %1482 = vmatpush1.bf16.msra.mxu0 0
        %1483 = vmatprep.subr.bf16.mxu0 0
        %1484 = vmatpush1.bf16.msra.mxu0 0
        %1485 = vmatprep.subr.bf16.mxu0 0
        %1486 = vmatpush1.bf16.msra.mxu0 0
        %1487 = vmatprep.subr.bf16.mxu0 0
        %1488 = vmatpush1.bf16.msra.mxu0 0
        %1489 = vmatprep.subr.bf16.mxu0 0
        %1490 = vmatpush1.bf16.msra.mxu0 0
        %1491 = vmatprep.subr.bf16.mxu0 0
        %1492 = vmatpush1.bf16.msra.mxu0 0
        %1493 = vmatprep.subr.bf16.mxu0 0
        %1494 = vmatpush1.bf16.msra.mxu0 0
        %1495 = vmatprep.subr.bf16.mxu0 0
        %1496 = vmatpush1.bf16.msra.mxu0 0
        %1497 = vmatprep.subr.bf16.mxu0 0
        %1498 = vmatpush1.bf16.msra.mxu0 0
        %1499 = vmatprep.mubr.bf16.mxu0 0
        %1500 = vmatmul.mubr.bf16.gmra.mrb[0].mxu0 %v1465
        %v1501 = vpop.f32.mrb[0].mxu0
        %v1502 = vadd.f32 %v1360, %v1501
        %v1503 = vpop.f32.mrb[0].mxu0
        %v1504 = vpop.f32.mrb[0].mxu0
        %v1505 = vpop.f32.mrb[0].mxu0
        %1506 = vdwg.mxu0
        %1507 = vst.msk [vmem:[%s611] sm:$0xff] %vm653, %v1502
        %s1508 = sand.u32 %s387, 1
        %s1509 = scalar_lea.sflag [#allocation5], %s1508
        %s1510 = sand.u32 %s387, 1
        %s1511 = smul.addr %s1510, 8
        %s1512 = scalar_lea.vmem [#allocation14], %s1511
        // Predicated region
        $region105: #{tpu_custom_call.1} parent=79 // pred_check
          %p1513 = pneg %p397
        $region106: #{tpu_custom_call.1} parent=79 // pred_check_branch
          %1515 = sbr.rel (%p1513) target = $region108
        $region107: #{tpu_custom_call.1} parent=79 // pred_region
          %s1517 = ssub.s32 128, 128
          %1518 = vsyncadd %s1509, %s1517
          %s1519 = sadd.s32 %s38, %s37
          %s1520 = smul.addr %s1519, 128
          %s1521 = scalar_lea.hbm %s15, %s1520
          %s1523 = sshll.u32 %s1512, 4
          %s1524 = int_to_ptr.vmem [resolvable:$true] %s1523
          %1526 = dma.vmem_to_hbm [thread:$0]  %s1524, 128, %s1521, %s1509
        $region108: #{tpu_custom_call.1} parent=79 // pred_fallthru
          _
      $region80: #{tpu_custom_call.1} parent=5 // pred_fallthru
        _
      %p1527 = scmp.le.s32.totalorder 2, %s28
      // Predicated region
      $region109: #{tpu_custom_call.1} parent=5 // pred_check
        %p1528 = pneg %p1527
      $region110: #{tpu_custom_call.1} parent=5 // pred_check_branch
        %1530 = sbr.rel (%p1528) target = $region112
      $region111: #{tpu_custom_call.1} parent=5 // pred_region
        %s1531 = ssub.s32 %s28, 2
        // Predicated region
        $region113: #{tpu_custom_call.1} parent=111 // pred_check
          %p1532 = pneg %p403
        $region114: #{tpu_custom_call.1} parent=111 // pred_check_branch
          %1534 = sbr.rel (%p1532) target = $region116
        $region115: #{tpu_custom_call.1} parent=111 // pred_region
          %s1535 = sand.u32 %s388, 1
          %s1536 = scalar_lea.sflag [#allocation5], %s1535
          %s1537 = sand.u32 %s388, 1
          %s1538 = smul.addr %s1537, 8
          %s1539 = scalar_lea.vmem [#allocation14], %s1538
          %1540 = dma.done %s1536, 128
        $region116: #{tpu_custom_call.1} parent=111 // pred_fallthru
          _
      $region112: #{tpu_custom_call.1} parent=5 // pred_fallthru
        _
    $region6: #{tpu_custom_call.1} parent=1 // loop_footer
      %s32 = sadd.s32 1, %s28
    $region7: #{tpu_custom_call.1} parent=1 // loop_footer_branch
      %27 = sbr.rel target = $region3
    $region8: #{tpu_custom_call.1} parent=1 // loop_exit
      _
    %1541 = vsyncpa [#allocation4], 1
    %s1542 = scalar_lea.sflag [#allocation4], 1
    %1543 = vsyncpa %s1542, 1
    %1544 = vsyncpa [#allocation7], 1
    %1545 = vsyncpa [#allocation10], 1
    %1546 = vsyncpa [#allocation13], 1
    %1547 = vsyncpa [#allocation5], 1
    %s1548 = scalar_lea.sflag [#allocation5], 1
    %1549 = vsyncpa %s1548, 1

</llo_original>
